<compile_context>
chip_gen: v6e
topology: v6e:2x2x1
jax: 0.10.0
libtpu: 0.0.40
codegen_flags: <defaults>
</compile_context>

<pallas_src>
import functools

import jax
import jax.numpy as jnp
from jax.experimental import pallas as pl
from jax.experimental.pallas import tpu as pltpu


def _round_up(v, m):
    return ((v + m - 1) // m) * m


def _disc_kernel(x_ref, w0_ref, b_ref, wd_ref, w1_ref, wlast_ref, wlin_ref, scal_ref,
                 o_ref, h3_ref, h5_ref, *, num_layers, B, T, C):
    L = num_layers
    BT = B * T
    f32 = jnp.float32
    mdt = wd_ref.dtype                                        # matmul operand dtype (bf16/f32)

    # Per-row time index (t within its own sequence), generated in-kernel (no extra DMA).
    t_idx = jax.lax.broadcasted_iota(jnp.int32, (BT, 1), 0) % T

    def shifted(h, delta):
        """s[b*T+t] = h[b*T + t + delta] if 0 <= t+delta < T else 0 (Conv1d zero pad)."""
        rolled = pltpu.roll(h, (-delta) % BT, 0)              # rolled[i] = h[(i+delta)%BT]
        keep = (t_idx < (T - delta)) if delta > 0 else (t_idx >= -delta)
        return jnp.where(keep, rolled, 0.0)

    # Zero the tap scratch once: pad lanes (>= 3C / >= 5C) stay exactly zero afterwards.
    h3_ref[...] = jnp.zeros_like(h3_ref)
    h5_ref[...] = jnp.zeros_like(h5_ref)

    # conv_1x1 (k=1) == channel matmul (MXU, f32 accumulation).
    h = (jnp.dot(x_ref[...].astype(mdt), w0_ref[...], preferred_element_type=f32)
         + b_ref[0:1, :])                                     # (BT, C) f32

    # Dilated residual stack: 3 taps packed into one 128-lane group -> one K-pass dot.
    for l in range(L):
        d = 2 ** l
        h3_ref[:, 0 * C:1 * C] = shifted(h, -d)
        h3_ref[:, 1 * C:2 * C] = h
        h3_ref[:, 2 * C:3 * C] = shifted(h, d)
        acc = (jnp.dot(h3_ref[...].astype(mdt), wd_ref[l], preferred_element_type=f32)
               + b_ref[1 + l:2 + l, :])
        acc = jnp.where(acc >= 0.0, acc, 0.01 * acc)          # F.leaky_relu default slope
        out = (jnp.dot(acc.astype(mdt), w1_ref[l], preferred_element_type=f32)
               + b_ref[1 + L + l:2 + L + l, :])
        # TODO(synk): nn.Dropout() is identity here (eval-mode forward).
        h = h + out

    # conv_1x1_last: k=5, valid.  Rows with t >= T-4 pick up wrapped data; the
    # block-diagonal wlin below has zeros there, so they never reach the output.
    for k in range(5):
        h5_ref[:, k * C:(k + 1) * C] = h if k == 0 else pltpu.roll(h, (-k) % BT, 0)

    blast = scal_ref[0]                                       # conv_1x1_last bias (SMEM)
    bl = scal_ref[1]                                          # linear bias (SMEM)
    u = jnp.sum(h5_ref[...] * wlast_ref[...], axis=1, keepdims=True) + blast   # (BT, 1)
    y = jnp.where(u >= 0.0, u, 0.2 * u)                       # nn.LeakyReLU(0.2)

    # Linear(T-4, 1) folded with the per-batch gather -> lane-dense (1, 128) store.
    o_ref[...] = jnp.sum(y * wlin_ref[...], axis=0, keepdims=True) + bl


def _pack_params(params, B, T, num_layers, matmul_dtype):
    """Logical (torch-derived) params -> fused, tap-packed, lane-sparse kernel layout."""
    L = num_layers
    Cin, C = params["w0"].shape
    KD = _round_up(3 * C, 128)         # dilated-conv contraction lanes (3 packed taps)
    K5 = _round_up(5 * C, 128)         # final-conv contraction lanes (5 packed taps)
    OUT_P = _round_up(max(B, 1), 128)  # lane-dense output width

    w0 = params["w0"].astype(matmul_dtype)                               # (Cin, C)
    w1 = params["w1"].astype(matmul_dtype)                               # (L, C, C)
    wd = jnp.zeros((L, KD, C), matmul_dtype)
    wd = wd.at[:, :3 * C, :].set(params["wd"].reshape(L, 3 * C, C).astype(matmul_dtype))

    # Packed biases (lane-sparse, f32): row 0 = b0, rows 1..L = bd, rows L+1..2L = b1.
    b_all = jnp.zeros((2 * L + 1, C), jnp.float32)
    b_all = b_all.at[0].set(params["b0"][0])
    b_all = b_all.at[1:1 + L].set(params["bd"])
    b_all = b_all.at[1 + L:1 + 2 * L].set(params["b1"])

    # conv_1x1_last weight: (5, 1, C) -> tap-major lane row (1, K5), pad lanes zero.
    wlast = jnp.zeros((1, K5), jnp.float32)
    wlast = wlast.at[0, :5 * C].set(params["wlast"][:, 0, :].reshape(5 * C))

    # Linear(T-4, 1) folded with the per-batch reduction: block-diagonal (B*T, OUT_P);
    # the last 4 time steps of each sequence get weight 0 (invalid valid-conv rows).
    row = jnp.concatenate([params["wl"][:, 0], jnp.zeros((4,), jnp.float32)])   # (T,)
    wlin = jnp.kron(jnp.eye(B, dtype=jnp.float32), row[:, None])                # (BT, B)
    wlin = jnp.pad(wlin, ((0, 0), (0, OUT_P - B)))                              # (BT, OUT_P)

    scalars = jnp.array([params["blast"][0, 0], params["bl"][0, 0]], jnp.float32)
    return w0, b_all, wd, w1, wlast, wlin, scalars, (KD, K5, OUT_P)


def conv1d_tq_discriminator(x, params, num_layers=3, matmul_dtype=jnp.bfloat16):
    """x: (B, T, Cin) float32; returns (B, 1) float32 (matches the torch forward)."""
    B, T, Cin = x.shape
    C = params["w0"].shape[1]
    L = num_layers
    # The roll+mask edge handling and wlin zeros assume these (review correctness note).
    assert T >= 5 and T > 2 ** (L - 1), "need T >= 5 and T > max dilation"
    assert B <= 128, "output packs B results into a single 128-lane vreg"

    (w0, b_all, wd, w1, wlast, wlin, scalars,
     (KD, K5, OUT_P)) = _pack_params(params, B, T, L, matmul_dtype)
    x_flat = x.reshape(B * T, Cin).astype(jnp.float32)

    # VMEM guard: grid-free design keeps everything resident; re-tile over B*T rows when
    # scaling (v7x has 64 MiB physical VMEM vs 128 MiB on v5e/v6e).
    vmem_limit = 32 * 1024 * 1024
    wbytes = jnp.dtype(matmul_dtype).itemsize
    approx = (4 * B * T * (Cin + KD + K5 + OUT_P + C)
              + wbytes * (Cin * C + L * KD * C + L * C * C)
              + 4 * ((2 * L + 1) * C + K5 + OUT_P))
    assert 2 * approx < vmem_limit, "problem too large for grid-free kernel: tile B*T"

    kern = functools.partial(_disc_kernel, num_layers=L, B=B, T=T, C=C)
    out = pl.pallas_call(
        kern,
        out_shape=jax.ShapeDtypeStruct((1, OUT_P), jnp.float32),
        # Grid-free: full-array blocks, each operand DMA'd into VMEM exactly once;
        # the two scalar biases ride the scalar path (SMEM).
        in_specs=[pl.BlockSpec(memory_space=pltpu.MemorySpace.VMEM)] * 7
                 + [pl.BlockSpec(memory_space=pltpu.MemorySpace.SMEM)],
        out_specs=pl.BlockSpec(memory_space=pltpu.MemorySpace.VMEM),
        scratch_shapes=[pltpu.VMEM((B * T, KD), jnp.float32),    # packed 3-tap buffer
                        pltpu.VMEM((B * T, K5), jnp.float32)],   # packed 5-tap buffer
        compiler_params=pltpu.CompilerParams(vmem_limit_bytes=vmem_limit),
    )(x_flat, w0, b_all, wd, w1, wlast, wlin, scalars)
    return out[:, :B].reshape(B, 1)                              # (B, 1)


def init_params(key, num_layers, input_dim, output_dim, pred_len):
    """Deterministic synthetic parameters (torch layouts converted for the kernel)."""
    keys = iter(jax.random.split(key, 8 + 4 * num_layers))

    def rnd(shape, scale=0.1):
        return scale * jax.random.normal(next(keys), shape, dtype=jnp.float32)

    C = output_dim
    p = {}
    # conv_1x1: torch weight (C, input_dim, 1), bias (C,)
    p["w0"] = jnp.transpose(rnd((C, input_dim, 1))[:, :, 0])        # (Cin, C)
    p["b0"] = rnd((1, C))
    wd, bd, w1, b1 = [], [], [], []
    for _ in range(num_layers):
        wd.append(jnp.transpose(rnd((C, C, 3)), (2, 1, 0)))         # (3, Cin, Cout)
        bd.append(rnd((C,)))
        w1.append(jnp.transpose(rnd((C, C, 1))[:, :, 0]))           # (Cin, Cout)
        b1.append(rnd((C,)))
    p["wd"] = jnp.stack(wd)                                         # (L, 3, C, C)
    p["bd"] = jnp.stack(bd)                                         # (L, C)
    p["w1"] = jnp.stack(w1)                                         # (L, C, C)
    p["b1"] = jnp.stack(b1)                                         # (L, C)
    # conv_1x1_last: torch weight (1, C, 5), bias (1,)
    p["wlast"] = jnp.transpose(rnd((1, C, 5)), (2, 0, 1))           # (5, 1, C)
    p["blast"] = rnd((1, 1))
    # linear: torch weight (1, pred_len-4), bias (1,)
    p["wl"] = jnp.transpose(rnd((1, pred_len - 4)))                 # (T-4, 1)
    p["bl"] = rnd((1, 1))
    return p


def reference(x, params, num_layers=3, matmul_dtype=jnp.float32):
    """Pure-jnp reference.  matmul_dtype=bf16 reproduces the kernel's precision policy
    (bf16 matmul operands, f32 accumulation); f32 is the torch-f32 semantics."""

    def mm(a, w):
        return jnp.dot(a.astype(matmul_dtype), w.astype(matmul_dtype),
                       preferred_element_type=jnp.float32)

    def shift(a, delta):
        if delta == 0:
            return a
        T, C = a.shape
        z = jnp.zeros((abs(delta), C), a.dtype)
        return (jnp.concatenate([a[delta:], z]) if delta > 0
                else jnp.concatenate([z, a[:T + delta]]))

    outs = []
    for b in range(x.shape[0]):
        h = mm(x[b], params["w0"]) + params["b0"]
        for l in range(num_layers):
            d = 2 ** l
            acc = sum(mm(shift(h, (k - 1) * d), params["wd"][l, k]) for k in range(3))
            acc = acc + params["bd"][l][None, :]
            acc = jnp.where(acc >= 0, acc, 0.01 * acc)
            h = h + (mm(acc, params["w1"][l]) + params["b1"][l][None, :])
        Tm4 = h.shape[0] - 4
        y = sum(jnp.sum(h[k:k + Tm4] * params["wlast"][k], axis=1, keepdims=True)
                for k in range(5))
        y = y + params["blast"]
        y = jnp.where(y >= 0, y, 0.2 * y)
        outs.append((jnp.sum(y * params["wl"], axis=0, keepdims=True) + params["bl"])[0])
    return jnp.stack(outs)                          # (B, 1)


if __name__ == "__main__":
    num_layers = 3
    input_dim = 32
    output_dim = 32
    pred_len = 16       # sequence length T; Linear acts on T - 4 after the k=5 conv
    B = 2

    key = jax.random.PRNGKey(0)
    kx, kp = jax.random.split(key)
    x = jax.random.normal(kx, (B, pred_len, input_dim), dtype=jnp.float32)
    params = init_params(kp, num_layers, input_dim, output_dim, pred_len)

    # bf16-weight fast path (default) and f32 path (strict torch-f32 semantics).
    out_bf16 = jax.block_until_ready(conv1d_tq_discriminator(x, params, num_layers))
    out_f32 = jax.block_until_ready(
        conv1d_tq_discriminator(x, params, num_layers, matmul_dtype=jnp.float32))

    ref_f32 = reference(x, params, num_layers)
    ref_bf16 = reference(x, params, num_layers, matmul_dtype=jnp.bfloat16)

    assert out_bf16.shape == (B, 1) and out_f32.shape == (B, 1)
    # Kernel algorithm exact (precision-matched references), tight tolerance:
    assert jnp.allclose(out_f32, ref_f32, atol=2e-4, rtol=2e-4), (out_f32, ref_f32)
    assert jnp.allclose(out_bf16, ref_bf16, atol=2e-4, rtol=2e-4), (out_bf16, ref_bf16)
    # bf16-weight quantization budget vs the pure-f32 torch semantics:
    assert jnp.allclose(out_bf16, ref_f32, atol=3e-2, rtol=3e-2), (out_bf16, ref_f32)
    print("KERNEL_OK")
</pallas_src>

<mosaic_0001>
module attributes {stable_mosaic.version = 11 : i64} {
  func.func @_disc_kernel(%arg0: memref<32x32xf32, #tpu.memory_space<vmem>>, %arg1: memref<32x32xbf16, #tpu.memory_space<vmem>>, %arg2: memref<7x32xf32, #tpu.memory_space<vmem>>, %arg3: memref<3x128x32xbf16, #tpu.memory_space<vmem>>, %arg4: memref<3x32x32xbf16, #tpu.memory_space<vmem>>, %arg5: memref<1x256xf32, #tpu.memory_space<vmem>>, %arg6: memref<32x128xf32, #tpu.memory_space<vmem>>, %arg7: memref<2xf32, #tpu.memory_space<smem>>, %arg8: memref<1x128xf32, #tpu.memory_space<vmem>>, %arg9: memref<32x128xf32, #tpu.memory_space<vmem>>, %arg10: memref<32x256xf32, #tpu.memory_space<vmem>>) attributes {dimension_semantics = [], scalar_prefetch = 0 : i64, scratch_operands = 2 : i64, tpu.core_type = #tpu.core_type<tc>} {
    %0 = tpu.iota {dimensions = array<i32: 0>} : vector<32x1xi32>
    %c16_i32 = arith.constant 16 : i32
    %c0_i32 = arith.constant 0 : i32
    %1 = arith.cmpi eq, %c16_i32, %c0_i32 : i32
    %c1_i32 = arith.constant 1 : i32
    %2 = arith.select %1, %c1_i32, %c16_i32 : i32
    %3 = vector.broadcast %2 : i32 to vector<32x1xi32>
    %4 = arith.remsi %0, %3 : vector<32x1xi32>
    %c0_i32_0 = arith.constant 0 : i32
    %5 = vector.broadcast %c0_i32_0 : i32 to vector<32x1xi32>
    %6 = arith.cmpi ne, %4, %5 : vector<32x1xi32>
    %c0_i32_1 = arith.constant 0 : i32
    %7 = vector.broadcast %c0_i32_1 : i32 to vector<32x1xi32>
    %8 = arith.cmpi slt, %4, %7 : vector<32x1xi32>
    %c0_i32_2 = arith.constant 0 : i32
    %9 = arith.cmpi slt, %2, %c0_i32_2 : i32
    %10 = vector.broadcast %9 : i1 to vector<32x1xi1>
    %11 = vector.broadcast %10 : vector<32x1xi1> to vector<32x1xi1>
    %12 = arith.xori %8, %11 : vector<32x1xi1>
    %13 = arith.andi %12, %6 : vector<32x1xi1>
    %14 = vector.broadcast %2 : i32 to vector<32x1xi32>
    %15 = arith.addi %4, %14 : vector<32x1xi32>
    %16 = arith.select %13, %15, %4 : vector<32x1xi1>, vector<32x1xi32>
    %cst = arith.constant 0.000000e+00 : f32
    %17 = vector.broadcast %cst : f32 to vector<32x128xf32>
    %c0 = arith.constant 0 : index
    %c0_3 = arith.constant 0 : index
    %18 = vector.load %arg9[%c0, %c0_3] : memref<32x128xf32, #tpu.memory_space<vmem>>, vector<32x128xf32>
    tpu.vector_store %arg9[%c0, %c0_3], %17 {strides = array<i32>} : memref<32x128xf32, #tpu.memory_space<vmem>>, vector<32x128xf32>,
    %cst_4 = arith.constant 0.000000e+00 : f32
    %19 = vector.broadcast %cst_4 : f32 to vector<32x256xf32>
    %c0_5 = arith.constant 0 : index
    %c0_6 = arith.constant 0 : index
    %20 = vector.load %arg10[%c0_5, %c0_6] : memref<32x256xf32, #tpu.memory_space<vmem>>, vector<32x256xf32>
    tpu.vector_store %arg10[%c0_5, %c0_6], %19 {strides = array<i32>} : memref<32x256xf32, #tpu.memory_space<vmem>>, vector<32x256xf32>,
    %c0_7 = arith.constant 0 : index
    %c0_8 = arith.constant 0 : index
    %21 = vector.load %arg0[%c0_7, %c0_8] : memref<32x32xf32, #tpu.memory_space<vmem>>, vector<32x32xf32>
    %22 = arith.truncf %21 : vector<32x32xf32> to vector<32x32xbf16>
    %c0_9 = arith.constant 0 : index
    %c0_10 = arith.constant 0 : index
    %23 = vector.load %arg1[%c0_9, %c0_10] : memref<32x32xbf16, #tpu.memory_space<vmem>>, vector<32x32xbf16>
    %cst_11 = arith.constant dense<0.000000e+00> : vector<32x32xf32>
    %24 = tpu.matmul %22, %23, %cst_11 {dimension_numbers = #tpu.dot_dimension_numbers<[1], [0], [0], [1], [0, 0, 1, 1], [], []>} : vector<32x32xbf16>, vector<32x32xbf16>, vector<32x32xf32> -> vector<32x32xf32>
    %c0_12 = arith.constant 0 : index
    %c0_13 = arith.constant 0 : index
    %25 = vector.load %arg2[%c0_12, %c0_13] : memref<7x32xf32, #tpu.memory_space<vmem>>, vector<1x32xf32>
    %26 = vector.broadcast %25 : vector<1x32xf32> to vector<32x32xf32>
    %27 = arith.addf %24, %26 : vector<32x32xf32>
    %c1_i32_14 = arith.constant 1 : i32
    %28 = tpu.dynamic_rotate %27 by %c1_i32_14 dim 0 : vector<32x32xf32>, i32 -> vector<32x32xf32>
    %c1_i32_15 = arith.constant 1 : i32
    %29 = vector.broadcast %c1_i32_15 : i32 to vector<32x1xi32>
    %30 = arith.cmpi sge, %16, %29 : vector<32x1xi32>
    %cst_16 = arith.constant 0.000000e+00 : f32
    %31 = vector.shape_cast %30 : vector<32x1xi1> to vector<32x1xi1>
    %32 = vector.broadcast %31 : vector<32x1xi1> to vector<32x32xi1>
    %33 = vector.broadcast %cst_16 : f32 to vector<32x32xf32>
    %34 = arith.select %32, %28, %33 : vector<32x32xi1>, vector<32x32xf32>
    %c0_17 = arith.constant 0 : index
    %c0_18 = arith.constant 0 : index
    %35 = vector.load %arg9[%c0_17, %c0_18] : memref<32x128xf32, #tpu.memory_space<vmem>>, vector<32x32xf32>
    tpu.vector_store %arg9[%c0_17, %c0_18], %34 {strides = array<i32>} : memref<32x128xf32, #tpu.memory_space<vmem>>, vector<32x32xf32>,
    %c0_19 = arith.constant 0 : index
    %c32 = arith.constant 32 : index
    %36 = vector.load %arg9[%c0_19, %c32] : memref<32x128xf32, #tpu.memory_space<vmem>>, vector<32x32xf32>
    tpu.vector_store %arg9[%c0_19, %c32], %27 {strides = array<i32>} : memref<32x128xf32, #tpu.memory_space<vmem>>, vector<32x32xf32>,
    %c31_i32 = arith.constant 31 : i32
    %37 = tpu.dynamic_rotate %27 by %c31_i32 dim 0 : vector<32x32xf32>, i32 -> vector<32x32xf32>
    %c15_i32 = arith.constant 15 : i32
    %38 = vector.broadcast %c15_i32 : i32 to vector<32x1xi32>
    %39 = arith.cmpi slt, %16, %38 : vector<32x1xi32>
    %cst_20 = arith.constant 0.000000e+00 : f32
    %40 = vector.shape_cast %39 : vector<32x1xi1> to vector<32x1xi1>
    %41 = vector.broadcast %40 : vector<32x1xi1> to vector<32x32xi1>
    %42 = vector.broadcast %cst_20 : f32 to vector<32x32xf32>
    %43 = arith.select %41, %37, %42 : vector<32x32xi1>, vector<32x32xf32>
    %c0_21 = arith.constant 0 : index
    %c64 = arith.constant 64 : index
    %44 = vector.load %arg9[%c0_21, %c64] : memref<32x128xf32, #tpu.memory_space<vmem>>, vector<32x32xf32>
    tpu.vector_store %arg9[%c0_21, %c64], %43 {strides = array<i32>} : memref<32x128xf32, #tpu.memory_space<vmem>>, vector<32x32xf32>,
    %c0_22 = arith.constant 0 : index
    %c0_23 = arith.constant 0 : index
    %45 = vector.load %arg9[%c0_22, %c0_23] : memref<32x128xf32, #tpu.memory_space<vmem>>, vector<32x128xf32>
    %46 = arith.truncf %45 : vector<32x128xf32> to vector<32x128xbf16>
    %c0_24 = arith.constant 0 : index
    %c0_25 = arith.constant 0 : index
    %c0_26 = arith.constant 0 : index
    %47 = vector.load %arg3[%c0_24, %c0_25, %c0_26] : memref<3x128x32xbf16, #tpu.memory_space<vmem>>, vector<1x128x32xbf16>
    %48 = vector.shape_cast %47 : vector<1x128x32xbf16> to vector<128x32xbf16>
    %cst_27 = arith.constant dense<0.000000e+00> : vector<32x32xf32>
    %49 = tpu.matmul %46, %48, %cst_27 {dimension_numbers = #tpu.dot_dimension_numbers<[1], [0], [0], [1], [0, 0, 1, 1], [], []>} : vector<32x128xbf16>, vector<128x32xbf16>, vector<32x32xf32> -> vector<32x32xf32>
    %c1 = arith.constant 1 : index
    %c0_28 = arith.constant 0 : index
    %50 = vector.load %arg2[%c1, %c0_28] : memref<7x32xf32, #tpu.memory_space<vmem>>, vector<1x32xf32>
    %51 = vector.broadcast %50 : vector<1x32xf32> to vector<32x32xf32>
    %52 = arith.addf %49, %51 : vector<32x32xf32>
    %cst_29 = arith.constant 0.000000e+00 : f32
    %53 = vector.broadcast %cst_29 : f32 to vector<32x32xf32>
    %54 = arith.cmpf oge, %52, %53 : vector<32x32xf32>
    %cst_30 = arith.constant 0.00999999977 : f32
    %55 = vector.broadcast %cst_30 : f32 to vector<32x32xf32>
    %56 = arith.mulf %55, %52 : vector<32x32xf32>
    %57 = arith.select %54, %52, %56 : vector<32x32xi1>, vector<32x32xf32>
    %58 = arith.truncf %57 : vector<32x32xf32> to vector<32x32xbf16>
    %c0_31 = arith.constant 0 : index
    %c0_32 = arith.constant 0 : index
    %c0_33 = arith.constant 0 : index
    %59 = vector.load %arg4[%c0_31, %c0_32, %c0_33] : memref<3x32x32xbf16, #tpu.memory_space<vmem>>, vector<1x32x32xbf16>
    %60 = vector.shape_cast %59 : vector<1x32x32xbf16> to vector<32x32xbf16>
    %cst_34 = arith.constant dense<0.000000e+00> : vector<32x32xf32>
    %61 = tpu.matmul %58, %60, %cst_34 {dimension_numbers = #tpu.dot_dimension_numbers<[1], [0], [0], [1], [0, 0, 1, 1], [], []>} : vector<32x32xbf16>, vector<32x32xbf16>, vector<32x32xf32> -> vector<32x32xf32>
    %c4 = arith.constant 4 : index
    %c0_35 = arith.constant 0 : index
    %62 = vector.load %arg2[%c4, %c0_35] : memref<7x32xf32, #tpu.memory_space<vmem>>, vector<1x32xf32>
    %63 = vector.broadcast %62 : vector<1x32xf32> to vector<32x32xf32>
    %64 = arith.addf %61, %63 : vector<32x32xf32>
    %65 = arith.addf %27, %64 : vector<32x32xf32>
    %c2_i32 = arith.constant 2 : i32
    %66 = tpu.dynamic_rotate %65 by %c2_i32 dim 0 : vector<32x32xf32>, i32 -> vector<32x32xf32>
    %c2_i32_36 = arith.constant 2 : i32
    %67 = vector.broadcast %c2_i32_36 : i32 to vector<32x1xi32>
    %68 = arith.cmpi sge, %16, %67 : vector<32x1xi32>
    %cst_37 = arith.constant 0.000000e+00 : f32
    %69 = vector.shape_cast %68 : vector<32x1xi1> to vector<32x1xi1>
    %70 = vector.broadcast %69 : vector<32x1xi1> to vector<32x32xi1>
    %71 = vector.broadcast %cst_37 : f32 to vector<32x32xf32>
    %72 = arith.select %70, %66, %71 : vector<32x32xi1>, vector<32x32xf32>
    %c0_38 = arith.constant 0 : index
    %c0_39 = arith.constant 0 : index
    %73 = vector.load %arg9[%c0_38, %c0_39] : memref<32x128xf32, #tpu.memory_space<vmem>>, vector<32x32xf32>
    tpu.vector_store %arg9[%c0_38, %c0_39], %72 {strides = array<i32>} : memref<32x128xf32, #tpu.memory_space<vmem>>, vector<32x32xf32>,
    %c0_40 = arith.constant 0 : index
    %c32_41 = arith.constant 32 : index
    %74 = vector.load %arg9[%c0_40, %c32_41] : memref<32x128xf32, #tpu.memory_space<vmem>>, vector<32x32xf32>
    tpu.vector_store %arg9[%c0_40, %c32_41], %65 {strides = array<i32>} : memref<32x128xf32, #tpu.memory_space<vmem>>, vector<32x32xf32>,
    %c30_i32 = arith.constant 30 : i32
    %75 = tpu.dynamic_rotate %65 by %c30_i32 dim 0 : vector<32x32xf32>, i32 -> vector<32x32xf32>
    %c14_i32 = arith.constant 14 : i32
    %76 = vector.broadcast %c14_i32 : i32 to vector<32x1xi32>
    %77 = arith.cmpi slt, %16, %76 : vector<32x1xi32>
    %cst_42 = arith.constant 0.000000e+00 : f32
    %78 = vector.shape_cast %77 : vector<32x1xi1> to vector<32x1xi1>
    %79 = vector.broadcast %78 : vector<32x1xi1> to vector<32x32xi1>
    %80 = vector.broadcast %cst_42 : f32 to vector<32x32xf32>
    %81 = arith.select %79, %75, %80 : vector<32x32xi1>, vector<32x32xf32>
    %c0_43 = arith.constant 0 : index
    %c64_44 = arith.constant 64 : index
    %82 = vector.load %arg9[%c0_43, %c64_44] : memref<32x128xf32, #tpu.memory_space<vmem>>, vector<32x32xf32>
    tpu.vector_store %arg9[%c0_43, %c64_44], %81 {strides = array<i32>} : memref<32x128xf32, #tpu.memory_space<vmem>>, vector<32x32xf32>,
    %c0_45 = arith.constant 0 : index
    %c0_46 = arith.constant 0 : index
    %83 = vector.load %arg9[%c0_45, %c0_46] : memref<32x128xf32, #tpu.memory_space<vmem>>, vector<32x128xf32>
    %84 = arith.truncf %83 : vector<32x128xf32> to vector<32x128xbf16>
    %c1_47 = arith.constant 1 : index
    %c0_48 = arith.constant 0 : index
    %c0_49 = arith.constant 0 : index
    %85 = vector.load %arg3[%c1_47, %c0_48, %c0_49] : memref<3x128x32xbf16, #tpu.memory_space<vmem>>, vector<1x128x32xbf16>
    %86 = vector.shape_cast %85 : vector<1x128x32xbf16> to vector<128x32xbf16>
    %cst_50 = arith.constant dense<0.000000e+00> : vector<32x32xf32>
    %87 = tpu.matmul %84, %86, %cst_50 {dimension_numbers = #tpu.dot_dimension_numbers<[1], [0], [0], [1], [0, 0, 1, 1], [], []>} : vector<32x128xbf16>, vector<128x32xbf16>, vector<32x32xf32> -> vector<32x32xf32>
    %c2 = arith.constant 2 : index
    %c0_51 = arith.constant 0 : index
    %88 = vector.load %arg2[%c2, %c0_51] : memref<7x32xf32, #tpu.memory_space<vmem>>, vector<1x32xf32>
    %89 = vector.broadcast %88 : vector<1x32xf32> to vector<32x32xf32>
    %90 = arith.addf %87, %89 : vector<32x32xf32>
    %cst_52 = arith.constant 0.000000e+00 : f32
    %91 = vector.broadcast %cst_52 : f32 to vector<32x32xf32>
    %92 = arith.cmpf oge, %90, %91 : vector<32x32xf32>
    %cst_53 = arith.constant 0.00999999977 : f32
    %93 = vector.broadcast %cst_53 : f32 to vector<32x32xf32>
    %94 = arith.mulf %93, %90 : vector<32x32xf32>
    %95 = arith.select %92, %90, %94 : vector<32x32xi1>, vector<32x32xf32>
    %96 = arith.truncf %95 : vector<32x32xf32> to vector<32x32xbf16>
    %c1_54 = arith.constant 1 : index
    %c0_55 = arith.constant 0 : index
    %c0_56 = arith.constant 0 : index
    %97 = vector.load %arg4[%c1_54, %c0_55, %c0_56] : memref<3x32x32xbf16, #tpu.memory_space<vmem>>, vector<1x32x32xbf16>
    %98 = vector.shape_cast %97 : vector<1x32x32xbf16> to vector<32x32xbf16>
    %cst_57 = arith.constant dense<0.000000e+00> : vector<32x32xf32>
    %99 = tpu.matmul %96, %98, %cst_57 {dimension_numbers = #tpu.dot_dimension_numbers<[1], [0], [0], [1], [0, 0, 1, 1], [], []>} : vector<32x32xbf16>, vector<32x32xbf16>, vector<32x32xf32> -> vector<32x32xf32>
    %c5 = arith.constant 5 : index
    %c0_58 = arith.constant 0 : index
    %100 = vector.load %arg2[%c5, %c0_58] : memref<7x32xf32, #tpu.memory_space<vmem>>, vector<1x32xf32>
    %101 = vector.broadcast %100 : vector<1x32xf32> to vector<32x32xf32>
    %102 = arith.addf %99, %101 : vector<32x32xf32>
    %103 = arith.addf %65, %102 : vector<32x32xf32>
    %c4_i32 = arith.constant 4 : i32
    %104 = tpu.dynamic_rotate %103 by %c4_i32 dim 0 : vector<32x32xf32>, i32 -> vector<32x32xf32>
    %c4_i32_59 = arith.constant 4 : i32
    %105 = vector.broadcast %c4_i32_59 : i32 to vector<32x1xi32>
    %106 = arith.cmpi sge, %16, %105 : vector<32x1xi32>
    %cst_60 = arith.constant 0.000000e+00 : f32
    %107 = vector.shape_cast %106 : vector<32x1xi1> to vector<32x1xi1>
    %108 = vector.broadcast %107 : vector<32x1xi1> to vector<32x32xi1>
    %109 = vector.broadcast %cst_60 : f32 to vector<32x32xf32>
    %110 = arith.select %108, %104, %109 : vector<32x32xi1>, vector<32x32xf32>
    %c0_61 = arith.constant 0 : index
    %c0_62 = arith.constant 0 : index
    %111 = vector.load %arg9[%c0_61, %c0_62] : memref<32x128xf32, #tpu.memory_space<vmem>>, vector<32x32xf32>
    tpu.vector_store %arg9[%c0_61, %c0_62], %110 {strides = array<i32>} : memref<32x128xf32, #tpu.memory_space<vmem>>, vector<32x32xf32>,
    %c0_63 = arith.constant 0 : index
    %c32_64 = arith.constant 32 : index
    %112 = vector.load %arg9[%c0_63, %c32_64] : memref<32x128xf32, #tpu.memory_space<vmem>>, vector<32x32xf32>
    tpu.vector_store %arg9[%c0_63, %c32_64], %103 {strides = array<i32>} : memref<32x128xf32, #tpu.memory_space<vmem>>, vector<32x32xf32>,
    %c28_i32 = arith.constant 28 : i32
    %113 = tpu.dynamic_rotate %103 by %c28_i32 dim 0 : vector<32x32xf32>, i32 -> vector<32x32xf32>
    %c12_i32 = arith.constant 12 : i32
    %114 = vector.broadcast %c12_i32 : i32 to vector<32x1xi32>
    %115 = arith.cmpi slt, %16, %114 : vector<32x1xi32>
    %cst_65 = arith.constant 0.000000e+00 : f32
    %116 = vector.shape_cast %115 : vector<32x1xi1> to vector<32x1xi1>
    %117 = vector.broadcast %116 : vector<32x1xi1> to vector<32x32xi1>
    %118 = vector.broadcast %cst_65 : f32 to vector<32x32xf32>
    %119 = arith.select %117, %113, %118 : vector<32x32xi1>, vector<32x32xf32>
    %c0_66 = arith.constant 0 : index
    %c64_67 = arith.constant 64 : index
    %120 = vector.load %arg9[%c0_66, %c64_67] : memref<32x128xf32, #tpu.memory_space<vmem>>, vector<32x32xf32>
    tpu.vector_store %arg9[%c0_66, %c64_67], %119 {strides = array<i32>} : memref<32x128xf32, #tpu.memory_space<vmem>>, vector<32x32xf32>,
    %c0_68 = arith.constant 0 : index
    %c0_69 = arith.constant 0 : index
    %121 = vector.load %arg9[%c0_68, %c0_69] : memref<32x128xf32, #tpu.memory_space<vmem>>, vector<32x128xf32>
    %122 = arith.truncf %121 : vector<32x128xf32> to vector<32x128xbf16>
    %c2_70 = arith.constant 2 : index
    %c0_71 = arith.constant 0 : index
    %c0_72 = arith.constant 0 : index
    %123 = vector.load %arg3[%c2_70, %c0_71, %c0_72] : memref<3x128x32xbf16, #tpu.memory_space<vmem>>, vector<1x128x32xbf16>
    %124 = vector.shape_cast %123 : vector<1x128x32xbf16> to vector<128x32xbf16>
    %cst_73 = arith.constant dense<0.000000e+00> : vector<32x32xf32>
    %125 = tpu.matmul %122, %124, %cst_73 {dimension_numbers = #tpu.dot_dimension_numbers<[1], [0], [0], [1], [0, 0, 1, 1], [], []>} : vector<32x128xbf16>, vector<128x32xbf16>, vector<32x32xf32> -> vector<32x32xf32>
    %c3 = arith.constant 3 : index
    %c0_74 = arith.constant 0 : index
    %126 = vector.load %arg2[%c3, %c0_74] : memref<7x32xf32, #tpu.memory_space<vmem>>, vector<1x32xf32>
    %127 = vector.broadcast %126 : vector<1x32xf32> to vector<32x32xf32>
    %128 = arith.addf %125, %127 : vector<32x32xf32>
    %cst_75 = arith.constant 0.000000e+00 : f32
    %129 = vector.broadcast %cst_75 : f32 to vector<32x32xf32>
    %130 = arith.cmpf oge, %128, %129 : vector<32x32xf32>
    %cst_76 = arith.constant 0.00999999977 : f32
    %131 = vector.broadcast %cst_76 : f32 to vector<32x32xf32>
    %132 = arith.mulf %131, %128 : vector<32x32xf32>
    %133 = arith.select %130, %128, %132 : vector<32x32xi1>, vector<32x32xf32>
    %134 = arith.truncf %133 : vector<32x32xf32> to vector<32x32xbf16>
    %c2_77 = arith.constant 2 : index
    %c0_78 = arith.constant 0 : index
    %c0_79 = arith.constant 0 : index
    %135 = vector.load %arg4[%c2_77, %c0_78, %c0_79] : memref<3x32x32xbf16, #tpu.memory_space<vmem>>, vector<1x32x32xbf16>
    %136 = vector.shape_cast %135 : vector<1x32x32xbf16> to vector<32x32xbf16>
    %cst_80 = arith.constant dense<0.000000e+00> : vector<32x32xf32>
    %137 = tpu.matmul %134, %136, %cst_80 {dimension_numbers = #tpu.dot_dimension_numbers<[1], [0], [0], [1], [0, 0, 1, 1], [], []>} : vector<32x32xbf16>, vector<32x32xbf16>, vector<32x32xf32> -> vector<32x32xf32>
    %c6 = arith.constant 6 : index
    %c0_81 = arith.constant 0 : index
    %138 = vector.load %arg2[%c6, %c0_81] : memref<7x32xf32, #tpu.memory_space<vmem>>, vector<1x32xf32>
    %139 = vector.broadcast %138 : vector<1x32xf32> to vector<32x32xf32>
    %140 = arith.addf %137, %139 : vector<32x32xf32>
    %141 = arith.addf %103, %140 : vector<32x32xf32>
    %c0_82 = arith.constant 0 : index
    %c0_83 = arith.constant 0 : index
    %142 = vector.load %arg10[%c0_82, %c0_83] : memref<32x256xf32, #tpu.memory_space<vmem>>, vector<32x32xf32>
    tpu.vector_store %arg10[%c0_82, %c0_83], %141 {strides = array<i32>} : memref<32x256xf32, #tpu.memory_space<vmem>>, vector<32x32xf32>,
    %c31_i32_84 = arith.constant 31 : i32
    %143 = tpu.dynamic_rotate %141 by %c31_i32_84 dim 0 : vector<32x32xf32>, i32 -> vector<32x32xf32>
    %c0_85 = arith.constant 0 : index
    %c32_86 = arith.constant 32 : index
    %144 = vector.load %arg10[%c0_85, %c32_86] : memref<32x256xf32, #tpu.memory_space<vmem>>, vector<32x32xf32>
    tpu.vector_store %arg10[%c0_85, %c32_86], %143 {strides = array<i32>} : memref<32x256xf32, #tpu.memory_space<vmem>>, vector<32x32xf32>,
    %c30_i32_87 = arith.constant 30 : i32
    %145 = tpu.dynamic_rotate %141 by %c30_i32_87 dim 0 : vector<32x32xf32>, i32 -> vector<32x32xf32>
    %c0_88 = arith.constant 0 : index
    %c64_89 = arith.constant 64 : index
    %146 = vector.load %arg10[%c0_88, %c64_89] : memref<32x256xf32, #tpu.memory_space<vmem>>, vector<32x32xf32>
    tpu.vector_store %arg10[%c0_88, %c64_89], %145 {strides = array<i32>} : memref<32x256xf32, #tpu.memory_space<vmem>>, vector<32x32xf32>,
    %c29_i32 = arith.constant 29 : i32
    %147 = tpu.dynamic_rotate %141 by %c29_i32 dim 0 : vector<32x32xf32>, i32 -> vector<32x32xf32>
    %c0_90 = arith.constant 0 : index
    %c96 = arith.constant 96 : index
    %148 = vector.load %arg10[%c0_90, %c96] : memref<32x256xf32, #tpu.memory_space<vmem>>, vector<32x32xf32>
    tpu.vector_store %arg10[%c0_90, %c96], %147 {strides = array<i32>} : memref<32x256xf32, #tpu.memory_space<vmem>>, vector<32x32xf32>,
    %c28_i32_91 = arith.constant 28 : i32
    %149 = tpu.dynamic_rotate %141 by %c28_i32_91 dim 0 : vector<32x32xf32>, i32 -> vector<32x32xf32>
    %c0_92 = arith.constant 0 : index
    %c128 = arith.constant 128 : index
    %150 = vector.load %arg10[%c0_92, %c128] : memref<32x256xf32, #tpu.memory_space<vmem>>, vector<32x32xf32>
    tpu.vector_store %arg10[%c0_92, %c128], %149 {strides = array<i32>} : memref<32x256xf32, #tpu.memory_space<vmem>>, vector<32x32xf32>,
    %c0_93 = arith.constant 0 : index
    %151 = memref.load %arg7[%c0_93] : memref<2xf32, #tpu.memory_space<smem>>
    %c1_94 = arith.constant 1 : index
    %152 = memref.load %arg7[%c1_94] : memref<2xf32, #tpu.memory_space<smem>>
    %c0_95 = arith.constant 0 : index
    %c0_96 = arith.constant 0 : index
    %153 = vector.load %arg10[%c0_95, %c0_96] : memref<32x256xf32, #tpu.memory_space<vmem>>, vector<32x256xf32>
    %c0_97 = arith.constant 0 : index
    %c0_98 = arith.constant 0 : index
    %154 = vector.load %arg5[%c0_97, %c0_98] : memref<1x256xf32, #tpu.memory_space<vmem>>, vector<1x256xf32>
    %155 = vector.broadcast %154 : vector<1x256xf32> to vector<32x256xf32>
    %156 = arith.mulf %153, %155 : vector<32x256xf32>
    %cst_99 = arith.constant dense<0.000000e+00> : vector<32xf32>
    %157 = vector.multi_reduction <add>, %156, %cst_99 [1] : vector<32x256xf32> to vector<32xf32>
    %158 = vector.shape_cast %157 : vector<32xf32> to vector<32x1xf32>
    %159 = vector.broadcast %151 : f32 to vector<32x1xf32>
    %160 = arith.addf %158, %159 : vector<32x1xf32>
    %cst_100 = arith.constant 0.000000e+00 : f32
    %161 = vector.broadcast %cst_100 : f32 to vector<32x1xf32>
    %162 = arith.cmpf oge, %160, %161 : vector<32x1xf32>
    %cst_101 = arith.constant 2.000000e-01 : f32
    %163 = vector.broadcast %cst_101 : f32 to vector<32x1xf32>
    %164 = arith.mulf %163, %160 : vector<32x1xf32>
    %165 = arith.select %162, %160, %164 : vector<32x1xi1>, vector<32x1xf32>
    %c0_102 = arith.constant 0 : index
    %c0_103 = arith.constant 0 : index
    %166 = vector.load %arg6[%c0_102, %c0_103] : memref<32x128xf32, #tpu.memory_space<vmem>>, vector<32x128xf32>
    %167 = vector.broadcast %165 : vector<32x1xf32> to vector<32x128xf32>
    %168 = arith.mulf %167, %166 : vector<32x128xf32>
    %cst_104 = arith.constant dense<0.000000e+00> : vector<128xf32>
    %169 = vector.multi_reduction <add>, %168, %cst_104 [0] : vector<32x128xf32> to vector<128xf32>
    %170 = vector.shape_cast %169 : vector<128xf32> to vector<1x128xf32>
    %171 = vector.broadcast %152 : f32 to vector<1x128xf32>
    %172 = arith.addf %170, %171 : vector<1x128xf32>
    %c0_105 = arith.constant 0 : index
    %c0_106 = arith.constant 0 : index
    %173 = vector.load %arg8[%c0_105, %c0_106] : memref<1x128xf32, #tpu.memory_space<vmem>>, vector<1x128xf32>
    tpu.vector_store %arg8[%c0_105, %c0_106], %172 {strides = array<i32>} : memref<1x128xf32, #tpu.memory_space<vmem>>, vector<1x128xf32>,
    return
  }
}

</mosaic_0001>

<llo_original>
// kernel: tpu_custom_call.1
$region0: #{tpu_custom_call.1}
  #allocation0 [shape = 'u32[]', space=smem, size = 0x4, offset = 0x4, fixed_abs, tag = 'smem constant byte address 0x4 - core index']
  #allocation1 [shape = 'u32[144,128]{1,0:T(1,128)}', space=vmem, size = 0x12000, scoped, tag = 'internal scratch']
  #allocation2 [shape = 'f32[32,128]{1,0:T(8,128)}', space=vmem, size = 0x4000, scoped, tag = 'scratch operand']
  #allocation3 [shape = 'f32[32,256]{1,0:T(8,128)}', space=vmem, size = 0x8000, scoped, tag = 'scratch operand']
  %s0 = inlined_call_operand.vmem [shape: f32[32,32], index: 0, kind: input, shape index: {}]
  %s1 = inlined_call_operand.vmem [shape: bf16[32,32], index: 1, kind: input, shape index: {}]
  %s2 = inlined_call_operand.vmem [shape: f32[7,32], index: 2, kind: input, shape index: {}]
  %s3 = inlined_call_operand.vmem [shape: bf16[3,128,32], index: 3, kind: input, shape index: {}]
  %s4 = inlined_call_operand.vmem [shape: bf16[3,32,32], index: 4, kind: input, shape index: {}]
  %s5 = inlined_call_operand.vmem [shape: f32[1,256], index: 5, kind: input, shape index: {}]
  %s6 = inlined_call_operand.vmem [shape: f32[32,128], index: 6, kind: input, shape index: {}]
  %s7 = inlined_call_operand.vmem [shape: f32[2], index: 7, kind: input, shape index: {}]
  %s8 = inlined_call_operand.hbm [shape: f32[1,128], index: 8, kind: output, shape index: {}]
  %s9 = sld [smem:[#allocation0]]
  $region46: #{tpu_custom_call.1} parent=0
    _
  %s11 = ssub.s32 1, %s9
  %s12 = scalar_select 0, %s11, %s9
  $region1: #{tpu_custom_call.1} parent=0
    #allocation4 [shape = 'u8[512]{0}', space=smem, size = 0x200, scoped, tag = 'input window, operand 7, single buffered']
    #allocation5 [shape = 's32[1]{0}', space=sflag, size = 0x4, scoped, tag = 'scoped memory for tpu_custom_call.1']
    #allocation6 [shape = 's32[1]{0}', space=sflag, size = 0x4, scoped, tag = 'scoped memory for tpu_custom_call.1']
    #allocation7 [shape = 'u8[512]{0}', space=vmem, size = 0x400, scoped, tag = 'output window, operand 0, single buffered']
    %13 = vsyncpa [#allocation6], 0
    %14 = vsyncpa [#allocation5], 0
    // Predicated region
    $region2: #{tpu_custom_call.1} parent=1 // pred_check
      _
    $region3: #{tpu_custom_call.1} parent=1 // pred_check_branch
      %16 = sbr.rel (0) target = $region5
    $region4: #{tpu_custom_call.1} parent=1 // pred_region
      _
    $region5: #{tpu_custom_call.1} parent=1 // pred_fallthru
      _
    // Predicated region
    $region6: #{tpu_custom_call.1} parent=1 // pred_check
      _
    $region7: #{tpu_custom_call.1} parent=1 // pred_check_branch
      %18 = sbr.rel (0) target = $region9
    $region8: #{tpu_custom_call.1} parent=1 // pred_region
      _
    $region9: #{tpu_custom_call.1} parent=1 // pred_fallthru
      _
    // Predicated region
    $region10: #{tpu_custom_call.1} parent=1 // pred_check
      _
    $region11: #{tpu_custom_call.1} parent=1 // pred_check_branch
      %20 = sbr.rel (0) target = $region13
    $region12: #{tpu_custom_call.1} parent=1 // pred_region
      _
    $region13: #{tpu_custom_call.1} parent=1 // pred_fallthru
      _
    // Predicated region
    $region14: #{tpu_custom_call.1} parent=1 // pred_check
      _
    $region15: #{tpu_custom_call.1} parent=1 // pred_check_branch
      %22 = sbr.rel (0) target = $region17
    $region16: #{tpu_custom_call.1} parent=1 // pred_region
      _
    $region17: #{tpu_custom_call.1} parent=1 // pred_fallthru
      _
    // Predicated region
    $region18: #{tpu_custom_call.1} parent=1 // pred_check
      _
    $region19: #{tpu_custom_call.1} parent=1 // pred_check_branch
      %24 = sbr.rel (0) target = $region21
    $region20: #{tpu_custom_call.1} parent=1 // pred_region
      _
    $region21: #{tpu_custom_call.1} parent=1 // pred_fallthru
      _
    // Predicated region
    $region22: #{tpu_custom_call.1} parent=1 // pred_check
      _
    $region23: #{tpu_custom_call.1} parent=1 // pred_check_branch
      %26 = sbr.rel (0) target = $region25
    $region24: #{tpu_custom_call.1} parent=1 // pred_region
      _
    $region25: #{tpu_custom_call.1} parent=1 // pred_fallthru
      _
    // Predicated region
    $region26: #{tpu_custom_call.1} parent=1 // pred_check
      _
    $region27: #{tpu_custom_call.1} parent=1 // pred_check_branch
      %28 = sbr.rel (0) target = $region29
    $region28: #{tpu_custom_call.1} parent=1 // pred_region
      _
    $region29: #{tpu_custom_call.1} parent=1 // pred_fallthru
      _
    // Predicated region
    $region30: #{tpu_custom_call.1} parent=1 // pred_check
      _
    $region31: #{tpu_custom_call.1} parent=1 // pred_check_branch
      %30 = sbr.rel (0) target = $region33
    $region32: #{tpu_custom_call.1} parent=1 // pred_region
      %s32 = ssub.s32 16, 16
      %33 = vsyncadd [#allocation6], %s32
      %s35 = sshll.u32 %s7, 4
      %s36 = int_to_ptr.vmem [resolvable:$true] %s35
      %38 = dma.vmem_to_smem %s36, 16, [#allocation4], [#allocation6]
    $region33: #{tpu_custom_call.1} parent=1 // pred_fallthru
      _
    // Predicated region
    $region34: #{tpu_custom_call.1} parent=1 // pred_check
      _
    $region35: #{tpu_custom_call.1} parent=1 // pred_check_branch
      %40 = sbr.rel (0) target = $region37
    $region36: #{tpu_custom_call.1} parent=1 // pred_region
      %41 = dma.done [#allocation6], 16
    $region37: #{tpu_custom_call.1} parent=1 // pred_fallthru
      _
    %42 = sfence
    %v44 = vlaneseq
    %v45 = vshrl.u32 %v44, 7
    %v46 = vadd.s32 %v45, 8
    %v47 = vadd.s32 %v45, 16
    %v48 = vadd.s32 %v45, 24
    %vm49 = vcmp.lt.s32.totalorder %v45, 0
    %v50 = vsub.s32 0, %v45
    %v51 = vsel %vm49, %v50, %v45
    %v52 = vshrl.u32 %v51, 4
    %v53 = vand.u32 %v51, 15
    %v54 = vsub.s32 0, %v53
    %v55 = vsel %vm49, %v54, %v53
    %vm56 = vcmp.lt.s32.totalorder %v46, 0
    %v57 = vsub.s32 0, %v46
    %v58 = vsel %vm56, %v57, %v46
    %v59 = vshrl.u32 %v58, 4
    %v60 = vand.u32 %v58, 15
    %v61 = vsub.s32 0, %v60
    %v62 = vsel %vm56, %v61, %v60
    %vm63 = vcmp.lt.s32.totalorder %v47, 0
    %v64 = vsub.s32 0, %v47
    %v65 = vsel %vm63, %v64, %v47
    %v66 = vshrl.u32 %v65, 4
    %v67 = vand.u32 %v65, 15
    %v68 = vsub.s32 0, %v67
    %v69 = vsel %vm63, %v68, %v67
    %vm70 = vcmp.lt.s32.totalorder %v48, 0
    %v71 = vsub.s32 0, %v48
    %v72 = vsel %vm70, %v71, %v48
    %v73 = vshrl.u32 %v72, 4
    %v74 = vand.u32 %v72, 15
    %v75 = vsub.s32 0, %v74
    %v76 = vsel %vm70, %v75, %v74
    %vm77 = vcmp.ne.s32.totalorder %v55, 0
    %vm78 = vcmp.ne.s32.totalorder %v62, 0
    %vm79 = vcmp.ne.s32.totalorder %v69, 0
    %vm80 = vcmp.ne.s32.totalorder %v76, 0
    %vm81 = vcmp.lt.s32.totalorder %v55, 0
    %vm82 = vcmp.lt.s32.totalorder %v62, 0
    %vm83 = vcmp.lt.s32.totalorder %v69, 0
    %vm84 = vcmp.lt.s32.totalorder %v76, 0
    %vm85 = vmand %vm81, %vm77
    %vm86 = vmand %vm82, %vm78
    %vm87 = vmand %vm83, %vm79
    %vm88 = vmand %vm84, %vm80
    %v89 = vadd.s32 %v55, 16
    %v90 = vadd.s32 %v62, 16
    %v91 = vadd.s32 %v69, 16
    %v92 = vadd.s32 %v76, 16
    %v93 = vsel %vm85, %v89, %v55
    %v94 = vsel %vm86, %v90, %v62
    %v95 = vsel %vm87, %v91, %v69
    %v96 = vsel %vm88, %v92, %v76
    %97 = vst [vmem:[#allocation2] sm:$0xff] 0.0
    %98 = vst [vmem:[#allocation2 + $0x8] sm:$0xff] 0.0
    %99 = vst [vmem:[#allocation2 + $0x10] sm:$0xff] 0.0
    %100 = vst [vmem:[#allocation2 + $0x18] sm:$0xff] 0.0
    %101 = vst [vmem:[#allocation3] sm:$0xff] 0.0
    %102 = vst [vmem:[#allocation3 + $0x8] sm:$0xff] 0.0
    %103 = vst [vmem:[#allocation3 + $0x10] sm:$0xff] 0.0
    %104 = vst [vmem:[#allocation3 + $0x18] sm:$0xff] 0.0
    %105 = vst [vmem:[#allocation3 + $0x20] sm:$0xff] 0.0
    %106 = vst [vmem:[#allocation3 + $0x28] sm:$0xff] 0.0
    %107 = vst [vmem:[#allocation3 + $0x30] sm:$0xff] 0.0
    %108 = vst [vmem:[#allocation3 + $0x38] sm:$0xff] 0.0
    %v109 = vld [vmem:[%s0] sm:$0xff]
    %v110 = vld [vmem:[%s0 + $0x8] sm:$0xff]
    %v111 = vld [vmem:[%s0 + $0x10] sm:$0xff]
    %v112 = vld [vmem:[%s0 + $0x18] sm:$0xff]
    %v113 = vpack.c.bf16 %v110, %v109
    %v114 = vpack.c.bf16 %v112, %v111
    %v115 = vld [vmem:[%s1] sm:$0xf]
    %v116 = vld [vmem:[%s1 + $0x4] sm:$0xf]
    %v117 = vld [vmem:[%s1 + $0x8] sm:$0xf]
    %v118 = vld [vmem:[%s1 + $0xc] sm:$0xf]
    %v119 = vld [vmem:[%s2] sm:$0x1]
    %v120 = vlaneseq
    %v121 = vshrl.u32 %v120, 7
    %v122 = vsub.s32 0, %v121
    %v123 = vrot.slane %v119, %v122
    %v128 = vunpack.c.l.b16 %v115
    %v129 = vunpack.c.l.b16 %v116
    %v130 = vunpack.c.l.b16 %v117
    %v131 = vunpack.c.l.b16 %v118
    %v132 = vpack.c.b16 %v129, %v128
    %v133 = vpack.c.b16 %v131, %v130
    %vm136 = vcmask 261120
    %v138 = vsel %vm136, %v113, 0
    %v141 = vsel %vm136, %v114, 0
    %143 = vmatprep.subr.bf16.mxu0 0
    %144 = vmatpush1.bf16.msra.mxu0 0
    %145 = vmatprep.subr.bf16.mxu0 0
    %146 = vmatpush1.bf16.msra.mxu0 0
    %147 = vmatprep.subr.bf16.mxu0 0
    %148 = vmatpush1.bf16.msra.mxu0 0
    %149 = vmatprep.subr.bf16.mxu0 0
    %150 = vmatpush1.bf16.msra.mxu0 0
    %151 = vmatprep.subr.bf16.mxu0 0
    %152 = vmatpush1.bf16.msra.mxu0 0
    %153 = vmatprep.subr.bf16.mxu0 0
    %154 = vmatpush1.bf16.msra.mxu0 0
    %155 = vmatprep.subr.bf16.mxu0 0
    %156 = vmatpush1.bf16.msra.mxu0 %v133
    %157 = vmatprep.subr.bf16.mxu0 0
    %158 = vmatpush1.bf16.msra.mxu0 %v132
    %159 = vmatprep.subr.bf16.mxu0 0
    %160 = vmatpush2.bf16.msra.mxu0 0
    %161 = vmatprep.subr.bf16.mxu0 0
    %162 = vmatpush2.bf16.msra.mxu0 0
    %163 = vmatprep.subr.bf16.mxu0 0
    %164 = vmatpush2.bf16.msra.mxu0 0
    %165 = vmatprep.subr.bf16.mxu0 0
    %166 = vmatpush2.bf16.msra.mxu0 0
    %167 = vmatprep.subr.bf16.mxu0 0
    %168 = vmatpush2.bf16.msra.mxu0 0
    %169 = vmatprep.subr.bf16.mxu0 0
    %170 = vmatpush2.bf16.msra.mxu0 0
    %171 = vmatprep.subr.bf16.mxu0 0
    %172 = vmatpush2.bf16.msra.mxu0 0
    %173 = vmatprep.subr.bf16.mxu0 0
    %174 = vmatpush2.bf16.msra.mxu0 0
    %175 = vmatprep.mubr.bf16.mxu0 0
    %176 = vmatmul.mubr.bf16.gmra.mxu0 %v138
    %v177 = vpop.f32.mrf.mxu0
    %v178 = vadd.f32 %v123, %v177
    %v179 = vpop.f32.mrf.mxu0
    %v180 = vpop.f32.mrf.mxu0
    %v181 = vadd.f32 %v123, %v180
    %v182 = vpop.f32.mrf.mxu0
    %183 = vmatprep.mubr.bf16.mxu0 0
    %184 = vmatmul.mubr.bf16.gmra.mxu0 %v141
    %v185 = vpop.f32.mrf.mxu0
    %v186 = vadd.f32 %v123, %v185
    %v187 = vpop.f32.mrf.mxu0
    %v188 = vpop.f32.mrf.mxu0
    %v189 = vadd.f32 %v123, %v188
    %v190 = vpop.f32.mrf.mxu0
    %191 = vdwg.mxu0
    %v192 = vrot.slane %v178, 7
    %v193 = vrot.slane %v181, 7
    %v194 = vrot.slane %v186, 7
    %v195 = vrot.slane %v189, 7
    %vm196 = vcmp.lt.s32.totalorder %v45, 1
    %v197 = vsel %vm196, %v194, %v195
    %v198 = vsel %vm196, %v193, %v194
    %v199 = vsel %vm196, %v192, %v193
    %v200 = vsel %vm196, %v195, %v192
    %vm201 = vcmp.ge.s32.totalorder %v93, 1
    %vm202 = vcmp.ge.s32.totalorder %v94, 1
    %vm203 = vcmp.ge.s32.totalorder %v95, 1
    %vm204 = vcmp.ge.s32.totalorder %v96, 1
    %v205 = vsel %vm201, 1, 0
    %v206 = vsel %vm202, 1, 0
    %v207 = vsel %vm203, 1, 0
    %v208 = vsel %vm204, 1, 0
    %vm209 = vcmp.eq.s32.totalorder %v205, 1
    %vm210 = vcmp.eq.s32.totalorder %v206, 1
    %vm211 = vcmp.eq.s32.totalorder %v207, 1
    %vm212 = vcmp.eq.s32.totalorder %v208, 1
    %v213 = vsel %vm209, %v200, 0.0
    %v214 = vsel %vm210, %v199, 0.0
    %v215 = vsel %vm211, %v198, 0.0
    %v216 = vsel %vm212, %v197, 0.0
    %217 = vst.msk [vmem:[#allocation2] sm:$0xff] %vm136, %v213
    %218 = vst.msk [vmem:[#allocation2 + $0x8] sm:$0xff] %vm136, %v214
    %219 = vst.msk [vmem:[#allocation2 + $0x10] sm:$0xff] %vm136, %v215
    %220 = vst.msk [vmem:[#allocation2 + $0x18] sm:$0xff] %vm136, %v216
    %225 = vrot.lane.b32.xlu0 %v178, 32
    %v226 = vpop.permute.xlu0 %225
    %227 = vrot.lane.b32.xlu0 %v181, 32
    %v228 = vpop.permute.xlu0 %227
    %229 = vrot.lane.b32.xlu0 %v186, 32
    %v230 = vpop.permute.xlu0 %229
    %231 = vrot.lane.b32.xlu0 %v189, 32
    %v232 = vpop.permute.xlu0 %231
    %vm237 = vcmask 523520
    %238 = vst.msk [vmem:[#allocation2] sm:$0xff] %vm237, %v226
    %239 = vst.msk [vmem:[#allocation2 + $0x8] sm:$0xff] %vm237, %v228
    %240 = vst.msk [vmem:[#allocation2 + $0x10] sm:$0xff] %vm237, %v230
    %241 = vst.msk [vmem:[#allocation2 + $0x18] sm:$0xff] %vm237, %v232
    %v242 = vrot.slane %v178, 1
    %v243 = vrot.slane %v181, 1
    %v244 = vrot.slane %v186, 1
    %v245 = vrot.slane %v189, 1
    %vm246 = vcmp.lt.s32.totalorder %v45, 7
    %v247 = vsel %vm246, %v244, %v245
    %v248 = vsel %vm246, %v243, %v244
    %v249 = vsel %vm246, %v242, %v243
    %v250 = vsel %vm246, %v245, %v242
    %vm251 = vcmp.lt.s32.totalorder %v93, 15
    %vm252 = vcmp.lt.s32.totalorder %v94, 15
    %vm253 = vcmp.lt.s32.totalorder %v95, 15
    %vm254 = vcmp.lt.s32.totalorder %v96, 15
    %v255 = vsel %vm251, 1, 0
    %v256 = vsel %vm252, 1, 0
    %v257 = vsel %vm253, 1, 0
    %v258 = vsel %vm254, 1, 0
    %vm259 = vcmp.eq.s32.totalorder %v255, 1
    %vm260 = vcmp.eq.s32.totalorder %v256, 1
    %vm261 = vcmp.eq.s32.totalorder %v257, 1
    %vm262 = vcmp.eq.s32.totalorder %v258, 1
    %v263 = vsel %vm259, %v249, 0.0
    %v264 = vsel %vm260, %v248, 0.0
    %v265 = vsel %vm261, %v247, 0.0
    %v266 = vsel %vm262, %v250, 0.0
    %271 = vrot.lane.b32.xlu0 %v263, 64
    %v272 = vpop.permute.xlu0 %271
    %273 = vrot.lane.b32.xlu0 %v264, 64
    %v274 = vpop.permute.xlu0 %273
    %275 = vrot.lane.b32.xlu0 %v265, 64
    %v276 = vpop.permute.xlu0 %275
    %277 = vrot.lane.b32.xlu0 %v266, 64
    %v278 = vpop.permute.xlu0 %277
    %vm283 = vcmask 785920
    %284 = vst.msk [vmem:[#allocation2] sm:$0xff] %vm283, %v272
    %285 = vst.msk [vmem:[#allocation2 + $0x8] sm:$0xff] %vm283, %v274
    %286 = vst.msk [vmem:[#allocation2 + $0x10] sm:$0xff] %vm283, %v276
    %287 = vst.msk [vmem:[#allocation2 + $0x18] sm:$0xff] %vm283, %v278
    %v288 = vld [vmem:[#allocation2] sm:$0xff]
    %v289 = vld [vmem:[#allocation2 + $0x8] sm:$0xff]
    %v290 = vld [vmem:[#allocation2 + $0x10] sm:$0xff]
    %v291 = vld [vmem:[#allocation2 + $0x18] sm:$0xff]
    %v292 = vpack.c.bf16 %v289, %v288
    %v293 = vpack.c.bf16 %v291, %v290
    %v294 = vld [vmem:[%s3] sm:$0xf]
    %v295 = vld [vmem:[%s3 + $0x4] sm:$0xf]
    %v296 = vld [vmem:[%s3 + $0x8] sm:$0xf]
    %v297 = vld [vmem:[%s3 + $0xc] sm:$0xf]
    %v298 = vld [vmem:[%s3 + $0x10] sm:$0xf]
    %v299 = vld [vmem:[%s3 + $0x14] sm:$0xf]
    %v300 = vld [vmem:[%s3 + $0x18] sm:$0xf]
    %v301 = vld [vmem:[%s3 + $0x1c] sm:$0xf]
    %v302 = vld [vmem:[%s3 + $0x20] sm:$0xf]
    %v303 = vld [vmem:[%s3 + $0x24] sm:$0xf]
    %v304 = vld [vmem:[%s3 + $0x28] sm:$0xf]
    %v305 = vld [vmem:[%s3 + $0x2c] sm:$0xf]
    %v306 = vld [vmem:[%s3 + $0x30] sm:$0xf]
    %v307 = vld [vmem:[%s3 + $0x34] sm:$0xf]
    %v308 = vld [vmem:[%s3 + $0x38] sm:$0xf]
    %v309 = vld [vmem:[%s3 + $0x3c] sm:$0xf]
    %v310 = vld [vmem:[%s2 + $0x1] sm:$0x1]
    %v311 = vlaneseq
    %v312 = vshrl.u32 %v311, 7
    %v313 = vsub.s32 0, %v312
    %v314 = vrot.slane %v310, %v313
    %v331 = vunpack.c.l.b16 %v294
    %v332 = vunpack.c.l.b16 %v295
    %v333 = vunpack.c.l.b16 %v296
    %v334 = vunpack.c.l.b16 %v297
    %v335 = vunpack.c.l.b16 %v298
    %v336 = vunpack.c.l.b16 %v299
    %v337 = vunpack.c.l.b16 %v300
    %v338 = vunpack.c.l.b16 %v301
    %v339 = vunpack.c.l.b16 %v302
    %v340 = vunpack.c.l.b16 %v303
    %v341 = vunpack.c.l.b16 %v304
    %v342 = vunpack.c.l.b16 %v305
    %v343 = vunpack.c.l.b16 %v306
    %v344 = vunpack.c.l.b16 %v307
    %v345 = vunpack.c.l.b16 %v308
    %v346 = vunpack.c.l.b16 %v309
    %v347 = vpack.c.b16 %v332, %v331
    %v348 = vpack.c.b16 %v334, %v333
    %v349 = vpack.c.b16 %v336, %v335
    %v350 = vpack.c.b16 %v338, %v337
    %v351 = vpack.c.b16 %v340, %v339
    %v352 = vpack.c.b16 %v342, %v341
    %v353 = vpack.c.b16 %v344, %v343
    %v354 = vpack.c.b16 %v346, %v345
    %363 = vmatprep.subr.bf16.mxu0 0
    %364 = vmatpush1.bf16.msra.mxu0 %v354
    %365 = vmatprep.subr.bf16.mxu0 0
    %366 = vmatpush1.bf16.msra.mxu0 %v353
    %367 = vmatprep.subr.bf16.mxu0 0
    %368 = vmatpush1.bf16.msra.mxu0 %v352
    %369 = vmatprep.subr.bf16.mxu0 0
    %370 = vmatpush1.bf16.msra.mxu0 %v351
    %371 = vmatprep.subr.bf16.mxu0 0
    %372 = vmatpush1.bf16.msra.mxu0 %v350
    %373 = vmatprep.subr.bf16.mxu0 0
    %374 = vmatpush1.bf16.msra.mxu0 %v349
    %375 = vmatprep.subr.bf16.mxu0 0
    %376 = vmatpush1.bf16.msra.mxu0 %v348
    %377 = vmatprep.subr.bf16.mxu0 0
    %378 = vmatpush1.bf16.msra.mxu0 %v347
    %379 = vmatprep.subr.bf16.mxu0 0
    %380 = vmatpush2.bf16.msra.mxu0 0
    %381 = vmatprep.subr.bf16.mxu0 0
    %382 = vmatpush2.bf16.msra.mxu0 0
    %383 = vmatprep.subr.bf16.mxu0 0
    %384 = vmatpush2.bf16.msra.mxu0 0
    %385 = vmatprep.subr.bf16.mxu0 0
    %386 = vmatpush2.bf16.msra.mxu0 0
    %387 = vmatprep.subr.bf16.mxu0 0
    %388 = vmatpush2.bf16.msra.mxu0 0
    %389 = vmatprep.subr.bf16.mxu0 0
    %390 = vmatpush2.bf16.msra.mxu0 0
    %391 = vmatprep.subr.bf16.mxu0 0
    %392 = vmatpush2.bf16.msra.mxu0 0
    %393 = vmatprep.subr.bf16.mxu0 0
    %394 = vmatpush2.bf16.msra.mxu0 0
    %395 = vmatprep.mubr.bf16.mxu0 0
    %396 = vmatmul.mubr.bf16.gmra.mxu0 %v292
    %v397 = vpop.f32.mrf.mxu0
    %v398 = vadd.f32 %v314, %v397
    %v399 = vpop.f32.mrf.mxu0
    %v400 = vpop.f32.mrf.mxu0
    %v401 = vadd.f32 %v314, %v400
    %v402 = vpop.f32.mrf.mxu0
    %403 = vmatprep.mubr.bf16.mxu0 0
    %404 = vmatmul.mubr.bf16.gmra.mxu0 %v293
    %v405 = vpop.f32.mrf.mxu0
    %v406 = vadd.f32 %v314, %v405
    %v407 = vpop.f32.mrf.mxu0
    %v408 = vpop.f32.mrf.mxu0
    %v409 = vadd.f32 %v314, %v408
    %v410 = vpop.f32.mrf.mxu0
    %411 = vdwg.mxu0
    %vm412 = vcmp.ge.f32.partialorder %v398, 0.0
    %vm413 = vcmp.ge.f32.partialorder %v401, 0.0
    %vm414 = vcmp.ge.f32.partialorder %v406, 0.0
    %vm415 = vcmp.ge.f32.partialorder %v409, 0.0
    %v416 = vmul.f32 %v398, 0.01
    %v417 = vmul.f32 %v401, 0.01
    %v418 = vmul.f32 %v406, 0.01
    %v419 = vmul.f32 %v409, 0.01
    %v420 = vsel %vm412, %v398, %v416
    %v421 = vsel %vm413, %v401, %v417
    %v422 = vsel %vm414, %v406, %v418
    %v423 = vsel %vm415, %v409, %v419
    %v424 = vpack.c.bf16 %v421, %v420
    %v425 = vpack.c.bf16 %v423, %v422
    %v426 = vld [vmem:[%s4] sm:$0xf]
    %v427 = vld [vmem:[%s4 + $0x4] sm:$0xf]
    %v428 = vld [vmem:[%s4 + $0x8] sm:$0xf]
    %v429 = vld [vmem:[%s4 + $0xc] sm:$0xf]
    %v430 = vld [vmem:[%s2 + $0x4] sm:$0x1]
    %v431 = vlaneseq
    %v432 = vshrl.u32 %v431, 7
    %v433 = vsub.s32 0, %v432
    %v434 = vrot.slane %v430, %v433
    %v439 = vunpack.c.l.b16 %v426
    %v440 = vunpack.c.l.b16 %v427
    %v441 = vunpack.c.l.b16 %v428
    %v442 = vunpack.c.l.b16 %v429
    %v443 = vpack.c.b16 %v440, %v439
    %v444 = vpack.c.b16 %v442, %v441
    %v448 = vsel %vm136, %v424, 0
    %v451 = vsel %vm136, %v425, 0
    %453 = vmatprep.subr.bf16.mxu0 0
    %454 = vmatpush1.bf16.msra.mxu0 0
    %455 = vmatprep.subr.bf16.mxu0 0
    %456 = vmatpush1.bf16.msra.mxu0 0
    %457 = vmatprep.subr.bf16.mxu0 0
    %458 = vmatpush1.bf16.msra.mxu0 0
    %459 = vmatprep.subr.bf16.mxu0 0
    %460 = vmatpush1.bf16.msra.mxu0 0
    %461 = vmatprep.subr.bf16.mxu0 0
    %462 = vmatpush1.bf16.msra.mxu0 0
    %463 = vmatprep.subr.bf16.mxu0 0
    %464 = vmatpush1.bf16.msra.mxu0 0
    %465 = vmatprep.subr.bf16.mxu0 0
    %466 = vmatpush1.bf16.msra.mxu0 %v444
    %467 = vmatprep.subr.bf16.mxu0 0
    %468 = vmatpush1.bf16.msra.mxu0 %v443
    %469 = vmatprep.subr.bf16.mxu0 0
    %470 = vmatpush2.bf16.msra.mxu0 0
    %471 = vmatprep.subr.bf16.mxu0 0
    %472 = vmatpush2.bf16.msra.mxu0 0
    %473 = vmatprep.subr.bf16.mxu0 0
    %474 = vmatpush2.bf16.msra.mxu0 0
    %475 = vmatprep.subr.bf16.mxu0 0
    %476 = vmatpush2.bf16.msra.mxu0 0
    %477 = vmatprep.subr.bf16.mxu0 0
    %478 = vmatpush2.bf16.msra.mxu0 0
    %479 = vmatprep.subr.bf16.mxu0 0
    %480 = vmatpush2.bf16.msra.mxu0 0
    %481 = vmatprep.subr.bf16.mxu0 0
    %482 = vmatpush2.bf16.msra.mxu0 0
    %483 = vmatprep.subr.bf16.mxu0 0
    %484 = vmatpush2.bf16.msra.mxu0 0
    %485 = vmatprep.mubr.bf16.mxu0 0
    %486 = vmatmul.mubr.bf16.gmra.mxu0 %v448
    %v487 = vpop.f32.mrf.mxu0
    %v488 = vadd.f32 %v434, %v487
    %v489 = vpop.f32.mrf.mxu0
    %v490 = vpop.f32.mrf.mxu0
    %v491 = vadd.f32 %v434, %v490
    %v492 = vpop.f32.mrf.mxu0
    %493 = vmatprep.mubr.bf16.mxu0 0
    %494 = vmatmul.mubr.bf16.gmra.mxu0 %v451
    %v495 = vpop.f32.mrf.mxu0
    %v496 = vadd.f32 %v434, %v495
    %v497 = vpop.f32.mrf.mxu0
    %v498 = vpop.f32.mrf.mxu0
    %v499 = vadd.f32 %v434, %v498
    %v500 = vpop.f32.mrf.mxu0
    %501 = vdwg.mxu0
    %v502 = vadd.f32 %v178, %v488
    %v503 = vadd.f32 %v181, %v491
    %v504 = vadd.f32 %v186, %v496
    %v505 = vadd.f32 %v189, %v499
    %v506 = vrot.slane %v502, 6
    %v507 = vrot.slane %v503, 6
    %v508 = vrot.slane %v504, 6
    %v509 = vrot.slane %v505, 6
    %vm510 = vcmp.lt.s32.totalorder %v45, 2
    %v511 = vsel %vm510, %v508, %v509
    %v512 = vsel %vm510, %v507, %v508
    %v513 = vsel %vm510, %v506, %v507
    %v514 = vsel %vm510, %v509, %v506
    %vm515 = vcmp.ge.s32.totalorder %v93, 2
    %vm516 = vcmp.ge.s32.totalorder %v94, 2
    %vm517 = vcmp.ge.s32.totalorder %v95, 2
    %vm518 = vcmp.ge.s32.totalorder %v96, 2
    %v519 = vsel %vm515, 1, 0
    %v520 = vsel %vm516, 1, 0
    %v521 = vsel %vm517, 1, 0
    %v522 = vsel %vm518, 1, 0
    %vm523 = vcmp.eq.s32.totalorder %v519, 1
    %vm524 = vcmp.eq.s32.totalorder %v520, 1
    %vm525 = vcmp.eq.s32.totalorder %v521, 1
    %vm526 = vcmp.eq.s32.totalorder %v522, 1
    %v527 = vsel %vm523, %v514, 0.0
    %v528 = vsel %vm524, %v513, 0.0
    %v529 = vsel %vm525, %v512, 0.0
    %v530 = vsel %vm526, %v511, 0.0
    %531 = vst.msk [vmem:[#allocation2] sm:$0xff] %vm136, %v527
    %532 = vst.msk [vmem:[#allocation2 + $0x8] sm:$0xff] %vm136, %v528
    %533 = vst.msk [vmem:[#allocation2 + $0x10] sm:$0xff] %vm136, %v529
    %534 = vst.msk [vmem:[#allocation2 + $0x18] sm:$0xff] %vm136, %v530
    %539 = vrot.lane.b32.xlu0 %v502, 32
    %v540 = vpop.permute.xlu0 %539
    %541 = vrot.lane.b32.xlu0 %v503, 32
    %v542 = vpop.permute.xlu0 %541
    %543 = vrot.lane.b32.xlu0 %v504, 32
    %v544 = vpop.permute.xlu0 %543
    %545 = vrot.lane.b32.xlu0 %v505, 32
    %v546 = vpop.permute.xlu0 %545
    %551 = vst.msk [vmem:[#allocation2] sm:$0xff] %vm237, %v540
    %552 = vst.msk [vmem:[#allocation2 + $0x8] sm:$0xff] %vm237, %v542
    %553 = vst.msk [vmem:[#allocation2 + $0x10] sm:$0xff] %vm237, %v544
    %554 = vst.msk [vmem:[#allocation2 + $0x18] sm:$0xff] %vm237, %v546
    %v555 = vrot.slane %v502, 2
    %v556 = vrot.slane %v503, 2
    %v557 = vrot.slane %v504, 2
    %v558 = vrot.slane %v505, 2
    %vm559 = vcmp.lt.s32.totalorder %v45, 6
    %v560 = vsel %vm559, %v557, %v558
    %v561 = vsel %vm559, %v556, %v557
    %v562 = vsel %vm559, %v555, %v556
    %v563 = vsel %vm559, %v558, %v555
    %vm564 = vcmp.lt.s32.totalorder %v93, 14
    %vm565 = vcmp.lt.s32.totalorder %v94, 14
    %vm566 = vcmp.lt.s32.totalorder %v95, 14
    %vm567 = vcmp.lt.s32.totalorder %v96, 14
    %v568 = vsel %vm564, 1, 0
    %v569 = vsel %vm565, 1, 0
    %v570 = vsel %vm566, 1, 0
    %v571 = vsel %vm567, 1, 0
    %vm572 = vcmp.eq.s32.totalorder %v568, 1
    %vm573 = vcmp.eq.s32.totalorder %v569, 1
    %vm574 = vcmp.eq.s32.totalorder %v570, 1
    %vm575 = vcmp.eq.s32.totalorder %v571, 1
    %v576 = vsel %vm572, %v562, 0.0
    %v577 = vsel %vm573, %v561, 0.0
    %v578 = vsel %vm574, %v560, 0.0
    %v579 = vsel %vm575, %v563, 0.0
    %584 = vrot.lane.b32.xlu0 %v576, 64
    %v585 = vpop.permute.xlu0 %584
    %586 = vrot.lane.b32.xlu0 %v577, 64
    %v587 = vpop.permute.xlu0 %586
    %588 = vrot.lane.b32.xlu0 %v578, 64
    %v589 = vpop.permute.xlu0 %588
    %590 = vrot.lane.b32.xlu0 %v579, 64
    %v591 = vpop.permute.xlu0 %590
    %596 = vst.msk [vmem:[#allocation2] sm:$0xff] %vm283, %v585
    %597 = vst.msk [vmem:[#allocation2 + $0x8] sm:$0xff] %vm283, %v587
    %598 = vst.msk [vmem:[#allocation2 + $0x10] sm:$0xff] %vm283, %v589
    %599 = vst.msk [vmem:[#allocation2 + $0x18] sm:$0xff] %vm283, %v591
    %v600 = vld [vmem:[#allocation2] sm:$0xff]
    %v601 = vld [vmem:[#allocation2 + $0x8] sm:$0xff]
    %v602 = vld [vmem:[#allocation2 + $0x10] sm:$0xff]
    %v603 = vld [vmem:[#allocation2 + $0x18] sm:$0xff]
    %v604 = vpack.c.bf16 %v601, %v600
    %v605 = vpack.c.bf16 %v603, %v602
    %s606 = scalar_lea.vmem %s3, 64
    %v607 = vld [vmem:[%s606] sm:$0xf]
    %v608 = vld [vmem:[%s606 + $0x4] sm:$0xf]
    %v609 = vld [vmem:[%s606 + $0x8] sm:$0xf]
    %v610 = vld [vmem:[%s606 + $0xc] sm:$0xf]
    %v611 = vld [vmem:[%s606 + $0x10] sm:$0xf]
    %v612 = vld [vmem:[%s606 + $0x14] sm:$0xf]
    %v613 = vld [vmem:[%s606 + $0x18] sm:$0xf]
    %v614 = vld [vmem:[%s606 + $0x1c] sm:$0xf]
    %v615 = vld [vmem:[%s606 + $0x20] sm:$0xf]
    %v616 = vld [vmem:[%s606 + $0x24] sm:$0xf]
    %v617 = vld [vmem:[%s606 + $0x28] sm:$0xf]
    %v618 = vld [vmem:[%s606 + $0x2c] sm:$0xf]
    %v619 = vld [vmem:[%s606 + $0x30] sm:$0xf]
    %v620 = vld [vmem:[%s606 + $0x34] sm:$0xf]
    %v621 = vld [vmem:[%s606 + $0x38] sm:$0xf]
    %v622 = vld [vmem:[%s606 + $0x3c] sm:$0xf]
    %v623 = vld [vmem:[%s2 + $0x2] sm:$0x1]
    %v624 = vlaneseq
    %v625 = vshrl.u32 %v624, 7
    %v626 = vsub.s32 0, %v625
    %v627 = vrot.slane %v623, %v626
    %v644 = vunpack.c.l.b16 %v607
    %v645 = vunpack.c.l.b16 %v608
    %v646 = vunpack.c.l.b16 %v609
    %v647 = vunpack.c.l.b16 %v610
    %v648 = vunpack.c.l.b16 %v611
    %v649 = vunpack.c.l.b16 %v612
    %v650 = vunpack.c.l.b16 %v613
    %v651 = vunpack.c.l.b16 %v614
    %v652 = vunpack.c.l.b16 %v615
    %v653 = vunpack.c.l.b16 %v616
    %v654 = vunpack.c.l.b16 %v617
    %v655 = vunpack.c.l.b16 %v618
    %v656 = vunpack.c.l.b16 %v619
    %v657 = vunpack.c.l.b16 %v620
    %v658 = vunpack.c.l.b16 %v621
    %v659 = vunpack.c.l.b16 %v622
    %v660 = vpack.c.b16 %v645, %v644
    %v661 = vpack.c.b16 %v647, %v646
    %v662 = vpack.c.b16 %v649, %v648
    %v663 = vpack.c.b16 %v651, %v650
    %v664 = vpack.c.b16 %v653, %v652
    %v665 = vpack.c.b16 %v655, %v654
    %v666 = vpack.c.b16 %v657, %v656
    %v667 = vpack.c.b16 %v659, %v658
    %676 = vmatprep.subr.bf16.mxu0 0
    %677 = vmatpush1.bf16.msra.mxu0 %v667
    %678 = vmatprep.subr.bf16.mxu0 0
    %679 = vmatpush1.bf16.msra.mxu0 %v666
    %680 = vmatprep.subr.bf16.mxu0 0
    %681 = vmatpush1.bf16.msra.mxu0 %v665
    %682 = vmatprep.subr.bf16.mxu0 0
    %683 = vmatpush1.bf16.msra.mxu0 %v664
    %684 = vmatprep.subr.bf16.mxu0 0
    %685 = vmatpush1.bf16.msra.mxu0 %v663
    %686 = vmatprep.subr.bf16.mxu0 0
    %687 = vmatpush1.bf16.msra.mxu0 %v662
    %688 = vmatprep.subr.bf16.mxu0 0
    %689 = vmatpush1.bf16.msra.mxu0 %v661
    %690 = vmatprep.subr.bf16.mxu0 0
    %691 = vmatpush1.bf16.msra.mxu0 %v660
    %692 = vmatprep.subr.bf16.mxu0 0
    %693 = vmatpush2.bf16.msra.mxu0 0
    %694 = vmatprep.subr.bf16.mxu0 0
    %695 = vmatpush2.bf16.msra.mxu0 0
    %696 = vmatprep.subr.bf16.mxu0 0
    %697 = vmatpush2.bf16.msra.mxu0 0
    %698 = vmatprep.subr.bf16.mxu0 0
    %699 = vmatpush2.bf16.msra.mxu0 0
    %700 = vmatprep.subr.bf16.mxu0 0
    %701 = vmatpush2.bf16.msra.mxu0 0
    %702 = vmatprep.subr.bf16.mxu0 0
    %703 = vmatpush2.bf16.msra.mxu0 0
    %704 = vmatprep.subr.bf16.mxu0 0
    %705 = vmatpush2.bf16.msra.mxu0 0
    %706 = vmatprep.subr.bf16.mxu0 0
    %707 = vmatpush2.bf16.msra.mxu0 0
    %708 = vmatprep.mubr.bf16.mxu0 0
    %709 = vmatmul.mubr.bf16.gmra.mxu0 %v604
    %v710 = vpop.f32.mrf.mxu0
    %v711 = vadd.f32 %v627, %v710
    %v712 = vpop.f32.mrf.mxu0
    %v713 = vpop.f32.mrf.mxu0
    %v714 = vadd.f32 %v627, %v713
    %v715 = vpop.f32.mrf.mxu0
    %716 = vmatprep.mubr.bf16.mxu0 0
    %717 = vmatmul.mubr.bf16.gmra.mxu0 %v605
    %v718 = vpop.f32.mrf.mxu0
    %v719 = vadd.f32 %v627, %v718
    %v720 = vpop.f32.mrf.mxu0
    %v721 = vpop.f32.mrf.mxu0
    %v722 = vadd.f32 %v627, %v721
    %v723 = vpop.f32.mrf.mxu0
    %724 = vdwg.mxu0
    %vm725 = vcmp.ge.f32.partialorder %v711, 0.0
    %vm726 = vcmp.ge.f32.partialorder %v714, 0.0
    %vm727 = vcmp.ge.f32.partialorder %v719, 0.0
    %vm728 = vcmp.ge.f32.partialorder %v722, 0.0
    %v729 = vmul.f32 %v711, 0.01
    %v730 = vmul.f32 %v714, 0.01
    %v731 = vmul.f32 %v719, 0.01
    %v732 = vmul.f32 %v722, 0.01
    %v733 = vsel %vm725, %v711, %v729
    %v734 = vsel %vm726, %v714, %v730
    %v735 = vsel %vm727, %v719, %v731
    %v736 = vsel %vm728, %v722, %v732
    %v737 = vpack.c.bf16 %v734, %v733
    %v738 = vpack.c.bf16 %v736, %v735
    %s739 = scalar_lea.vmem %s4, 16
    %v740 = vld [vmem:[%s739] sm:$0xf]
    %v741 = vld [vmem:[%s739 + $0x4] sm:$0xf]
    %v742 = vld [vmem:[%s739 + $0x8] sm:$0xf]
    %v743 = vld [vmem:[%s739 + $0xc] sm:$0xf]
    %v744 = vld [vmem:[%s2 + $0x5] sm:$0x1]
    %v745 = vlaneseq
    %v746 = vshrl.u32 %v745, 7
    %v747 = vsub.s32 0, %v746
    %v748 = vrot.slane %v744, %v747
    %v753 = vunpack.c.l.b16 %v740
    %v754 = vunpack.c.l.b16 %v741
    %v755 = vunpack.c.l.b16 %v742
    %v756 = vunpack.c.l.b16 %v743
    %v757 = vpack.c.b16 %v754, %v753
    %v758 = vpack.c.b16 %v756, %v755
    %v762 = vsel %vm136, %v737, 0
    %v765 = vsel %vm136, %v738, 0
    %767 = vmatprep.subr.bf16.mxu0 0
    %768 = vmatpush1.bf16.msra.mxu0 0
    %769 = vmatprep.subr.bf16.mxu0 0
    %770 = vmatpush1.bf16.msra.mxu0 0
    %771 = vmatprep.subr.bf16.mxu0 0
    %772 = vmatpush1.bf16.msra.mxu0 0
    %773 = vmatprep.subr.bf16.mxu0 0
    %774 = vmatpush1.bf16.msra.mxu0 0
    %775 = vmatprep.subr.bf16.mxu0 0
    %776 = vmatpush1.bf16.msra.mxu0 0
    %777 = vmatprep.subr.bf16.mxu0 0
    %778 = vmatpush1.bf16.msra.mxu0 0
    %779 = vmatprep.subr.bf16.mxu0 0
    %780 = vmatpush1.bf16.msra.mxu0 %v758
    %781 = vmatprep.subr.bf16.mxu0 0
    %782 = vmatpush1.bf16.msra.mxu0 %v757
    %783 = vmatprep.subr.bf16.mxu0 0
    %784 = vmatpush2.bf16.msra.mxu0 0
    %785 = vmatprep.subr.bf16.mxu0 0
    %786 = vmatpush2.bf16.msra.mxu0 0
    %787 = vmatprep.subr.bf16.mxu0 0
    %788 = vmatpush2.bf16.msra.mxu0 0
    %789 = vmatprep.subr.bf16.mxu0 0
    %790 = vmatpush2.bf16.msra.mxu0 0
    %791 = vmatprep.subr.bf16.mxu0 0
    %792 = vmatpush2.bf16.msra.mxu0 0
    %793 = vmatprep.subr.bf16.mxu0 0
    %794 = vmatpush2.bf16.msra.mxu0 0
    %795 = vmatprep.subr.bf16.mxu0 0
    %796 = vmatpush2.bf16.msra.mxu0 0
    %797 = vmatprep.subr.bf16.mxu0 0
    %798 = vmatpush2.bf16.msra.mxu0 0
    %799 = vmatprep.mubr.bf16.mxu0 0
    %800 = vmatmul.mubr.bf16.gmra.mxu0 %v762
    %v801 = vpop.f32.mrf.mxu0
    %v802 = vadd.f32 %v748, %v801
    %v803 = vpop.f32.mrf.mxu0
    %v804 = vpop.f32.mrf.mxu0
    %v805 = vadd.f32 %v748, %v804
    %v806 = vpop.f32.mrf.mxu0
    %807 = vmatprep.mubr.bf16.mxu0 0
    %808 = vmatmul.mubr.bf16.gmra.mxu0 %v765
    %v809 = vpop.f32.mrf.mxu0
    %v810 = vadd.f32 %v748, %v809
    %v811 = vpop.f32.mrf.mxu0
    %v812 = vpop.f32.mrf.mxu0
    %v813 = vadd.f32 %v748, %v812
    %v814 = vpop.f32.mrf.mxu0
    %815 = vdwg.mxu0
    %v816 = vadd.f32 %v502, %v802
    %v817 = vadd.f32 %v503, %v805
    %v818 = vadd.f32 %v504, %v810
    %v819 = vadd.f32 %v505, %v813
    %v820 = vrot.slane %v816, 4
    %v821 = vrot.slane %v817, 4
    %v822 = vrot.slane %v818, 4
    %v823 = vrot.slane %v819, 4
    %vm824 = vcmp.lt.s32.totalorder %v45, 4
    %v825 = vsel %vm824, %v822, %v823
    %v826 = vsel %vm824, %v821, %v822
    %v827 = vsel %vm824, %v820, %v821
    %v828 = vsel %vm824, %v823, %v820
    %vm829 = vcmp.ge.s32.totalorder %v93, 4
    %vm830 = vcmp.ge.s32.totalorder %v94, 4
    %vm831 = vcmp.ge.s32.totalorder %v95, 4
    %vm832 = vcmp.ge.s32.totalorder %v96, 4
    %v833 = vsel %vm829, 1, 0
    %v834 = vsel %vm830, 1, 0
    %v835 = vsel %vm831, 1, 0
    %v836 = vsel %vm832, 1, 0
    %vm837 = vcmp.eq.s32.totalorder %v833, 1
    %vm838 = vcmp.eq.s32.totalorder %v834, 1
    %vm839 = vcmp.eq.s32.totalorder %v835, 1
    %vm840 = vcmp.eq.s32.totalorder %v836, 1
    %v841 = vsel %vm837, %v828, 0.0
    %v842 = vsel %vm838, %v827, 0.0
    %v843 = vsel %vm839, %v826, 0.0
    %v844 = vsel %vm840, %v825, 0.0
    %845 = vst.msk [vmem:[#allocation2] sm:$0xff] %vm136, %v841
    %846 = vst.msk [vmem:[#allocation2 + $0x8] sm:$0xff] %vm136, %v842
    %847 = vst.msk [vmem:[#allocation2 + $0x10] sm:$0xff] %vm136, %v843
    %848 = vst.msk [vmem:[#allocation2 + $0x18] sm:$0xff] %vm136, %v844
    %853 = vrot.lane.b32.xlu0 %v816, 32
    %v854 = vpop.permute.xlu0 %853
    %855 = vrot.lane.b32.xlu0 %v817, 32
    %v856 = vpop.permute.xlu0 %855
    %857 = vrot.lane.b32.xlu0 %v818, 32
    %v858 = vpop.permute.xlu0 %857
    %859 = vrot.lane.b32.xlu0 %v819, 32
    %v860 = vpop.permute.xlu0 %859
    %865 = vst.msk [vmem:[#allocation2] sm:$0xff] %vm237, %v854
    %866 = vst.msk [vmem:[#allocation2 + $0x8] sm:$0xff] %vm237, %v856
    %867 = vst.msk [vmem:[#allocation2 + $0x10] sm:$0xff] %vm237, %v858
    %868 = vst.msk [vmem:[#allocation2 + $0x18] sm:$0xff] %vm237, %v860
    %vm869 = vcmp.lt.s32.totalorder %v93, 12
    %vm870 = vcmp.lt.s32.totalorder %v94, 12
    %vm871 = vcmp.lt.s32.totalorder %v95, 12
    %vm872 = vcmp.lt.s32.totalorder %v96, 12
    %v873 = vsel %vm869, 1, 0
    %v874 = vsel %vm870, 1, 0
    %v875 = vsel %vm871, 1, 0
    %v876 = vsel %vm872, 1, 0
    %vm877 = vcmp.eq.s32.totalorder %v873, 1
    %vm878 = vcmp.eq.s32.totalorder %v874, 1
    %vm879 = vcmp.eq.s32.totalorder %v875, 1
    %vm880 = vcmp.eq.s32.totalorder %v876, 1
    %v881 = vsel %vm877, %v827, 0.0
    %v882 = vsel %vm878, %v826, 0.0
    %v883 = vsel %vm879, %v825, 0.0
    %v884 = vsel %vm880, %v828, 0.0
    %889 = vrot.lane.b32.xlu0 %v881, 64
    %v890 = vpop.permute.xlu0 %889
    %891 = vrot.lane.b32.xlu0 %v882, 64
    %v892 = vpop.permute.xlu0 %891
    %893 = vrot.lane.b32.xlu0 %v883, 64
    %v894 = vpop.permute.xlu0 %893
    %895 = vrot.lane.b32.xlu0 %v884, 64
    %v896 = vpop.permute.xlu0 %895
    %901 = vst.msk [vmem:[#allocation2] sm:$0xff] %vm283, %v890
    %902 = vst.msk [vmem:[#allocation2 + $0x8] sm:$0xff] %vm283, %v892
    %903 = vst.msk [vmem:[#allocation2 + $0x10] sm:$0xff] %vm283, %v894
    %904 = vst.msk [vmem:[#allocation2 + $0x18] sm:$0xff] %vm283, %v896
    %v905 = vld [vmem:[#allocation2] sm:$0xff]
    %v906 = vld [vmem:[#allocation2 + $0x8] sm:$0xff]
    %v907 = vld [vmem:[#allocation2 + $0x10] sm:$0xff]
    %v908 = vld [vmem:[#allocation2 + $0x18] sm:$0xff]
    %v909 = vpack.c.bf16 %v906, %v905
    %v910 = vpack.c.bf16 %v908, %v907
    %s911 = scalar_lea.vmem %s3, 128
    %v912 = vld [vmem:[%s911] sm:$0xf]
    %v913 = vld [vmem:[%s911 + $0x4] sm:$0xf]
    %v914 = vld [vmem:[%s911 + $0x8] sm:$0xf]
    %v915 = vld [vmem:[%s911 + $0xc] sm:$0xf]
    %v916 = vld [vmem:[%s911 + $0x10] sm:$0xf]
    %v917 = vld [vmem:[%s911 + $0x14] sm:$0xf]
    %v918 = vld [vmem:[%s911 + $0x18] sm:$0xf]
    %v919 = vld [vmem:[%s911 + $0x1c] sm:$0xf]
    %v920 = vld [vmem:[%s911 + $0x20] sm:$0xf]
    %v921 = vld [vmem:[%s911 + $0x24] sm:$0xf]
    %v922 = vld [vmem:[%s911 + $0x28] sm:$0xf]
    %v923 = vld [vmem:[%s911 + $0x2c] sm:$0xf]
    %v924 = vld [vmem:[%s911 + $0x30] sm:$0xf]
    %v925 = vld [vmem:[%s911 + $0x34] sm:$0xf]
    %v926 = vld [vmem:[%s911 + $0x38] sm:$0xf]
    %v927 = vld [vmem:[%s911 + $0x3c] sm:$0xf]
    %v928 = vld [vmem:[%s2 + $0x3] sm:$0x1]
    %v929 = vlaneseq
    %v930 = vshrl.u32 %v929, 7
    %v931 = vsub.s32 0, %v930
    %v932 = vrot.slane %v928, %v931
    %v949 = vunpack.c.l.b16 %v912
    %v950 = vunpack.c.l.b16 %v913
    %v951 = vunpack.c.l.b16 %v914
    %v952 = vunpack.c.l.b16 %v915
    %v953 = vunpack.c.l.b16 %v916
    %v954 = vunpack.c.l.b16 %v917
    %v955 = vunpack.c.l.b16 %v918
    %v956 = vunpack.c.l.b16 %v919
    %v957 = vunpack.c.l.b16 %v920
    %v958 = vunpack.c.l.b16 %v921
    %v959 = vunpack.c.l.b16 %v922
    %v960 = vunpack.c.l.b16 %v923
    %v961 = vunpack.c.l.b16 %v924
    %v962 = vunpack.c.l.b16 %v925
    %v963 = vunpack.c.l.b16 %v926
    %v964 = vunpack.c.l.b16 %v927
    %v965 = vpack.c.b16 %v950, %v949
    %v966 = vpack.c.b16 %v952, %v951
    %v967 = vpack.c.b16 %v954, %v953
    %v968 = vpack.c.b16 %v956, %v955
    %v969 = vpack.c.b16 %v958, %v957
    %v970 = vpack.c.b16 %v960, %v959
    %v971 = vpack.c.b16 %v962, %v961
    %v972 = vpack.c.b16 %v964, %v963
    %981 = vmatprep.subr.bf16.mxu0 0
    %982 = vmatpush1.bf16.msra.mxu0 %v972
    %983 = vmatprep.subr.bf16.mxu0 0
    %984 = vmatpush1.bf16.msra.mxu0 %v971
    %985 = vmatprep.subr.bf16.mxu0 0
    %986 = vmatpush1.bf16.msra.mxu0 %v970
    %987 = vmatprep.subr.bf16.mxu0 0
    %988 = vmatpush1.bf16.msra.mxu0 %v969
    %989 = vmatprep.subr.bf16.mxu0 0
    %990 = vmatpush1.bf16.msra.mxu0 %v968
    %991 = vmatprep.subr.bf16.mxu0 0
    %992 = vmatpush1.bf16.msra.mxu0 %v967
    %993 = vmatprep.subr.bf16.mxu0 0
    %994 = vmatpush1.bf16.msra.mxu0 %v966
    %995 = vmatprep.subr.bf16.mxu0 0
    %996 = vmatpush1.bf16.msra.mxu0 %v965
    %997 = vmatprep.subr.bf16.mxu0 0
    %998 = vmatpush2.bf16.msra.mxu0 0
    %999 = vmatprep.subr.bf16.mxu0 0
    %1000 = vmatpush2.bf16.msra.mxu0 0
    %1001 = vmatprep.subr.bf16.mxu0 0
    %1002 = vmatpush2.bf16.msra.mxu0 0
    %1003 = vmatprep.subr.bf16.mxu0 0
    %1004 = vmatpush2.bf16.msra.mxu0 0
    %1005 = vmatprep.subr.bf16.mxu0 0
    %1006 = vmatpush2.bf16.msra.mxu0 0
    %1007 = vmatprep.subr.bf16.mxu0 0
    %1008 = vmatpush2.bf16.msra.mxu0 0
    %1009 = vmatprep.subr.bf16.mxu0 0
    %1010 = vmatpush2.bf16.msra.mxu0 0
    %1011 = vmatprep.subr.bf16.mxu0 0
    %1012 = vmatpush2.bf16.msra.mxu0 0
    %1013 = vmatprep.mubr.bf16.mxu0 0
    %1014 = vmatmul.mubr.bf16.gmra.mxu0 %v909
    %v1015 = vpop.f32.mrf.mxu0
    %v1016 = vadd.f32 %v932, %v1015
    %v1017 = vpop.f32.mrf.mxu0
    %v1018 = vpop.f32.mrf.mxu0
    %v1019 = vadd.f32 %v932, %v1018
    %v1020 = vpop.f32.mrf.mxu0
    %1021 = vmatprep.mubr.bf16.mxu0 0
    %1022 = vmatmul.mubr.bf16.gmra.mxu0 %v910
    %v1023 = vpop.f32.mrf.mxu0
    %v1024 = vadd.f32 %v932, %v1023
    %v1025 = vpop.f32.mrf.mxu0
    %v1026 = vpop.f32.mrf.mxu0
    %v1027 = vadd.f32 %v932, %v1026
    %v1028 = vpop.f32.mrf.mxu0
    %1029 = vdwg.mxu0
    %vm1030 = vcmp.ge.f32.partialorder %v1016, 0.0
    %vm1031 = vcmp.ge.f32.partialorder %v1019, 0.0
    %vm1032 = vcmp.ge.f32.partialorder %v1024, 0.0
    %vm1033 = vcmp.ge.f32.partialorder %v1027, 0.0
    %v1034 = vmul.f32 %v1016, 0.01
    %v1035 = vmul.f32 %v1019, 0.01
    %v1036 = vmul.f32 %v1024, 0.01
    %v1037 = vmul.f32 %v1027, 0.01
    %v1038 = vsel %vm1030, %v1016, %v1034
    %v1039 = vsel %vm1031, %v1019, %v1035
    %v1040 = vsel %vm1032, %v1024, %v1036
    %v1041 = vsel %vm1033, %v1027, %v1037
    %v1042 = vpack.c.bf16 %v1039, %v1038
    %v1043 = vpack.c.bf16 %v1041, %v1040
    %s1044 = scalar_lea.vmem %s4, 32
    %v1045 = vld [vmem:[%s1044] sm:$0xf]
    %v1046 = vld [vmem:[%s1044 + $0x4] sm:$0xf]
    %v1047 = vld [vmem:[%s1044 + $0x8] sm:$0xf]
    %v1048 = vld [vmem:[%s1044 + $0xc] sm:$0xf]
    %v1049 = vld [vmem:[%s2 + $0x6] sm:$0x1]
    %v1050 = vlaneseq
    %v1051 = vshrl.u32 %v1050, 7
    %v1052 = vsub.s32 0, %v1051
    %v1053 = vrot.slane %v1049, %v1052
    %v1058 = vunpack.c.l.b16 %v1045
    %v1059 = vunpack.c.l.b16 %v1046
    %v1060 = vunpack.c.l.b16 %v1047
    %v1061 = vunpack.c.l.b16 %v1048
    %v1062 = vpack.c.b16 %v1059, %v1058
    %v1063 = vpack.c.b16 %v1061, %v1060
    %v1067 = vsel %vm136, %v1042, 0
    %v1070 = vsel %vm136, %v1043, 0
    %1072 = vmatprep.subr.bf16.mxu0 0
    %1073 = vmatpush1.bf16.msra.mxu0 0
    %1074 = vmatprep.subr.bf16.mxu0 0
    %1075 = vmatpush1.bf16.msra.mxu0 0
    %1076 = vmatprep.subr.bf16.mxu0 0
    %1077 = vmatpush1.bf16.msra.mxu0 0
    %1078 = vmatprep.subr.bf16.mxu0 0
    %1079 = vmatpush1.bf16.msra.mxu0 0
    %1080 = vmatprep.subr.bf16.mxu0 0
    %1081 = vmatpush1.bf16.msra.mxu0 0
    %1082 = vmatprep.subr.bf16.mxu0 0
    %1083 = vmatpush1.bf16.msra.mxu0 0
    %1084 = vmatprep.subr.bf16.mxu0 0
    %1085 = vmatpush1.bf16.msra.mxu0 %v1063
    %1086 = vmatprep.subr.bf16.mxu0 0
    %1087 = vmatpush1.bf16.msra.mxu0 %v1062
    %1088 = vmatprep.subr.bf16.mxu0 0
    %1089 = vmatpush2.bf16.msra.mxu0 0
    %1090 = vmatprep.subr.bf16.mxu0 0
    %1091 = vmatpush2.bf16.msra.mxu0 0
    %1092 = vmatprep.subr.bf16.mxu0 0
    %1093 = vmatpush2.bf16.msra.mxu0 0
    %1094 = vmatprep.subr.bf16.mxu0 0
    %1095 = vmatpush2.bf16.msra.mxu0 0
    %1096 = vmatprep.subr.bf16.mxu0 0
    %1097 = vmatpush2.bf16.msra.mxu0 0
    %1098 = vmatprep.subr.bf16.mxu0 0
    %1099 = vmatpush2.bf16.msra.mxu0 0
    %1100 = vmatprep.subr.bf16.mxu0 0
    %1101 = vmatpush2.bf16.msra.mxu0 0
    %1102 = vmatprep.subr.bf16.mxu0 0
    %1103 = vmatpush2.bf16.msra.mxu0 0
    %1104 = vmatprep.mubr.bf16.mxu0 0
    %1105 = vmatmul.mubr.bf16.gmra.mxu0 %v1067
    %v1106 = vpop.f32.mrf.mxu0
    %v1107 = vadd.f32 %v1053, %v1106
    %v1108 = vpop.f32.mrf.mxu0
    %v1109 = vpop.f32.mrf.mxu0
    %v1110 = vadd.f32 %v1053, %v1109
    %v1111 = vpop.f32.mrf.mxu0
    %1112 = vmatprep.mubr.bf16.mxu0 0
    %1113 = vmatmul.mubr.bf16.gmra.mxu0 %v1070
    %v1114 = vpop.f32.mrf.mxu0
    %v1115 = vadd.f32 %v1053, %v1114
    %v1116 = vpop.f32.mrf.mxu0
    %v1117 = vpop.f32.mrf.mxu0
    %v1118 = vadd.f32 %v1053, %v1117
    %v1119 = vpop.f32.mrf.mxu0
    %1120 = vdwg.mxu0
    %v1121 = vadd.f32 %v816, %v1107
    %v1122 = vadd.f32 %v817, %v1110
    %v1123 = vadd.f32 %v818, %v1115
    %v1124 = vadd.f32 %v819, %v1118
    %1125 = vst.msk [vmem:[#allocation3] sm:$0xff] %vm136, %v1121
    %1126 = vst.msk [vmem:[#allocation3 + $0x10] sm:$0xff] %vm136, %v1122
    %1127 = vst.msk [vmem:[#allocation3 + $0x20] sm:$0xff] %vm136, %v1123
    %1128 = vst.msk [vmem:[#allocation3 + $0x30] sm:$0xff] %vm136, %v1124
    %v1129 = vrot.slane %v1121, 1
    %v1130 = vrot.slane %v1122, 1
    %v1131 = vrot.slane %v1123, 1
    %v1132 = vrot.slane %v1124, 1
    %v1133 = vsel %vm246, %v1131, %v1132
    %v1134 = vsel %vm246, %v1130, %v1131
    %v1135 = vsel %vm246, %v1129, %v1130
    %v1136 = vsel %vm246, %v1132, %v1129
    %1141 = vrot.lane.b32.xlu0 %v1135, 32
    %v1142 = vpop.permute.xlu0 %1141
    %1143 = vrot.lane.b32.xlu0 %v1134, 32
    %v1144 = vpop.permute.xlu0 %1143
    %1145 = vrot.lane.b32.xlu0 %v1133, 32
    %v1146 = vpop.permute.xlu0 %1145
    %1147 = vrot.lane.b32.xlu0 %v1136, 32
    %v1148 = vpop.permute.xlu0 %1147
    %1153 = vst.msk [vmem:[#allocation3] sm:$0xff] %vm237, %v1142
    %1154 = vst.msk [vmem:[#allocation3 + $0x10] sm:$0xff] %vm237, %v1144
    %1155 = vst.msk [vmem:[#allocation3 + $0x20] sm:$0xff] %vm237, %v1146
    %1156 = vst.msk [vmem:[#allocation3 + $0x30] sm:$0xff] %vm237, %v1148
    %v1157 = vrot.slane %v1121, 2
    %v1158 = vrot.slane %v1122, 2
    %v1159 = vrot.slane %v1123, 2
    %v1160 = vrot.slane %v1124, 2
    %v1161 = vsel %vm559, %v1159, %v1160
    %v1162 = vsel %vm559, %v1158, %v1159
    %v1163 = vsel %vm559, %v1157, %v1158
    %v1164 = vsel %vm559, %v1160, %v1157
    %1169 = vrot.lane.b32.xlu0 %v1163, 64
    %v1170 = vpop.permute.xlu0 %1169
    %1171 = vrot.lane.b32.xlu0 %v1162, 64
    %v1172 = vpop.permute.xlu0 %1171
    %1173 = vrot.lane.b32.xlu0 %v1161, 64
    %v1174 = vpop.permute.xlu0 %1173
    %1175 = vrot.lane.b32.xlu0 %v1164, 64
    %v1176 = vpop.permute.xlu0 %1175
    %1181 = vst.msk [vmem:[#allocation3] sm:$0xff] %vm283, %v1170
    %1182 = vst.msk [vmem:[#allocation3 + $0x10] sm:$0xff] %vm283, %v1172
    %1183 = vst.msk [vmem:[#allocation3 + $0x20] sm:$0xff] %vm283, %v1174
    %1184 = vst.msk [vmem:[#allocation3 + $0x30] sm:$0xff] %vm283, %v1176
    %v1185 = vrot.slane %v1121, 3
    %v1186 = vrot.slane %v1122, 3
    %v1187 = vrot.slane %v1123, 3
    %v1188 = vrot.slane %v1124, 3
    %vm1189 = vcmp.lt.s32.totalorder %v45, 5
    %v1190 = vsel %vm1189, %v1187, %v1188
    %v1191 = vsel %vm1189, %v1186, %v1187
    %v1192 = vsel %vm1189, %v1185, %v1186
    %v1193 = vsel %vm1189, %v1188, %v1185
    %1198 = vrot.lane.b32.xlu0 %v1192, 96
    %v1199 = vpop.permute.xlu0 %1198
    %1200 = vrot.lane.b32.xlu0 %v1191, 96
    %v1201 = vpop.permute.xlu0 %1200
    %1202 = vrot.lane.b32.xlu0 %v1190, 96
    %v1203 = vpop.permute.xlu0 %1202
    %1204 = vrot.lane.b32.xlu0 %v1193, 96
    %v1205 = vpop.permute.xlu0 %1204
    %vm1210 = vcmask 1048320
    %1211 = vst.msk [vmem:[#allocation3] sm:$0xff] %vm1210, %v1199
    %1212 = vst.msk [vmem:[#allocation3 + $0x10] sm:$0xff] %vm1210, %v1201
    %1213 = vst.msk [vmem:[#allocation3 + $0x20] sm:$0xff] %vm1210, %v1203
    %1214 = vst.msk [vmem:[#allocation3 + $0x30] sm:$0xff] %vm1210, %v1205
    %v1215 = vrot.slane %v1121, 4
    %v1216 = vrot.slane %v1122, 4
    %v1217 = vrot.slane %v1123, 4
    %v1218 = vrot.slane %v1124, 4
    %v1219 = vsel %vm824, %v1217, %v1218
    %v1220 = vsel %vm824, %v1216, %v1217
    %v1221 = vsel %vm824, %v1215, %v1216
    %v1222 = vsel %vm824, %v1218, %v1215
    %1223 = vst.msk [vmem:[#allocation3 + $0x8] sm:$0xff] %vm136, %v1221
    %1224 = vst.msk [vmem:[#allocation3 + $0x18] sm:$0xff] %vm136, %v1220
    %1225 = vst.msk [vmem:[#allocation3 + $0x28] sm:$0xff] %vm136, %v1219
    %1226 = vst.msk [vmem:[#allocation3 + $0x38] sm:$0xff] %vm136, %v1222
    %s1227 = sld [smem:[#allocation4]]
    %s1228 = sld [smem:[#allocation4 + $0x1]]
    %v1229 = vld [vmem:[#allocation3] sm:$0xff]
    %v1230 = vld [vmem:[#allocation3 + $0x8] sm:$0xff]
    %v1231 = vld [vmem:[#allocation3 + $0x10] sm:$0xff]
    %v1232 = vld [vmem:[#allocation3 + $0x18] sm:$0xff]
    %v1233 = vld [vmem:[#allocation3 + $0x20] sm:$0xff]
    %v1234 = vld [vmem:[#allocation3 + $0x28] sm:$0xff]
    %v1235 = vld [vmem:[#allocation3 + $0x30] sm:$0xff]
    %v1236 = vld [vmem:[#allocation3 + $0x38] sm:$0xff]
    %v1237 = vld [vmem:[%s5] sm:$0x3]
    %v1239 = vlaneseq
    %v1240 = vshrl.u32 %v1239, 7
    %v1241 = vsub.s32 0, %v1240
    %v1242 = vrot.slane %v1237, %v1241
    %v1243 = vlaneseq
    %v1244 = vshrl.u32 %v1243, 7
    %v1245 = vsub.s32 1, %v1244
    %v1246 = vrot.slane %v1237, %v1245
    %v1249 = vmul.f32 %v1229, %v1242
    %v1250 = vmul.f32 %v1230, %v1246
    %v1251 = vmul.f32 %v1231, %v1242
    %v1252 = vmul.f32 %v1232, %v1246
    %v1253 = vmul.f32 %v1233, %v1242
    %v1254 = vmul.f32 %v1234, %v1246
    %v1255 = vmul.f32 %v1235, %v1242
    %v1256 = vmul.f32 %v1236, %v1246
    %v1257 = vadd.f32 %v1249, %v1250
    %1258 = vadd.xlane.f32.xlu0 %v1257
    %v1259 = vpop.xlane.xlu0 %1258
    %v1260 = vadd.f32 %v1251, %v1252
    %1261 = vadd.xlane.f32.xlu0 %v1260
    %v1262 = vpop.xlane.xlu0 %1261
    %v1263 = vadd.f32 %v1253, %v1254
    %1264 = vadd.xlane.f32.xlu0 %v1263
    %v1265 = vpop.xlane.xlu0 %1264
    %v1266 = vadd.f32 %v1255, %v1256
    %1267 = vadd.xlane.f32.xlu0 %v1266
    %v1268 = vpop.xlane.xlu0 %1267
    %v1269 = vstv %s1227
    %v1270 = vadd.f32 %v1259, %v1269
    %v1271 = vadd.f32 %v1262, %v1269
    %v1272 = vadd.f32 %v1265, %v1269
    %v1273 = vadd.f32 %v1268, %v1269
    %vm1274 = vcmp.ge.f32.partialorder %v1270, 0.0
    %vm1275 = vcmp.ge.f32.partialorder %v1271, 0.0
    %vm1276 = vcmp.ge.f32.partialorder %v1272, 0.0
    %vm1277 = vcmp.ge.f32.partialorder %v1273, 0.0
    %v1278 = vmul.f32 %v1270, 0.2
    %v1279 = vmul.f32 %v1271, 0.2
    %v1280 = vmul.f32 %v1272, 0.2
    %v1281 = vmul.f32 %v1273, 0.2
    %v1282 = vsel %vm1274, %v1270, %v1278
    %v1283 = vsel %vm1275, %v1271, %v1279
    %v1284 = vsel %vm1276, %v1272, %v1280
    %v1285 = vsel %vm1277, %v1273, %v1281
    %v1286 = vld [vmem:[%s6] sm:$0xff]
    %v1287 = vld [vmem:[%s6 + $0x8] sm:$0xff]
    %v1288 = vld [vmem:[%s6 + $0x10] sm:$0xff]
    %v1289 = vld [vmem:[%s6 + $0x18] sm:$0xff]
    %v1290 = vmul.f32 %v1282, %v1286
    %v1291 = vmul.f32 %v1283, %v1287
    %v1292 = vmul.f32 %v1284, %v1288
    %v1293 = vmul.f32 %v1285, %v1289
    %v1294 = vadd.f32 %v1290, %v1291
    %v1295 = vadd.f32 %v1294, %v1292
    %v1296 = vadd.f32 %v1295, %v1293
    %v1297 = vrot.slane %v1296, 4
    %v1298 = vadd.f32 %v1296, %v1297
    %v1299 = vrot.slane %v1298, 2
    %v1300 = vadd.f32 %v1298, %v1299
    %v1301 = vrot.slane %v1300, 1
    %v1302 = vadd.f32 %v1300, %v1301
    %v1303 = vstv %s1228
    %v1304 = vadd.f32 %v1302, %v1303
    %1305 = vst [vmem:[#allocation7] sm:$0x1] %v1304
    // Predicated region
    $region38: #{tpu_custom_call.1} parent=1 // pred_check
      _
    $region39: #{tpu_custom_call.1} parent=1 // pred_check_branch
      %1307 = sbr.rel (0) target = $region41
    $region40: #{tpu_custom_call.1} parent=1 // pred_region
      %s1309 = ssub.s32 16, 16
      %1310 = vsyncadd [#allocation5], %s1309
      %s1312 = sshll.u32 [#allocation7], 4
      %s1313 = int_to_ptr.vmem [resolvable:$true] %s1312
      %1315 = dma.vmem_to_hbm [thread:$0]  %s1313, 16, %s8, [#allocation5]
    $region41: #{tpu_custom_call.1} parent=1 // pred_fallthru
      _
    // Predicated region
    $region42: #{tpu_custom_call.1} parent=1 // pred_check
      _
    $region43: #{tpu_custom_call.1} parent=1 // pred_check_branch
      %1317 = sbr.rel (0) target = $region45
    $region44: #{tpu_custom_call.1} parent=1 // pred_region
      %1318 = dma.done [#allocation5], 16
    $region45: #{tpu_custom_call.1} parent=1 // pred_fallthru
      _
    %1319 = vsyncpa [#allocation5], 1
    %1320 = vsyncpa [#allocation6], 1

</llo_original>
